<compile_context>
chip_gen: v7x
topology: tpu7x:2x2x1
jax: 0.10.0
libtpu: 0.0.40
codegen_flags: <defaults>
</compile_context>

<pallas_src>
import functools

import jax
import jax.numpy as jnp
from jax import lax
from jax.experimental import pallas as pl
from jax.experimental.pallas import tpu as pltpu


# ----------------------------- in-kernel helpers ----------------------------

def _layernorm(x, g_ref, b_ref, eps):
    mu = jnp.mean(x, axis=-1, keepdims=True)
    var = jnp.mean((x - mu) ** 2, axis=-1, keepdims=True)
    y = (x - mu) * lax.rsqrt(var + eps)
    return y * g_ref[...].astype(jnp.float32) + b_ref[...].astype(jnp.float32)


def _gelu_exact(x):
    # exact (erf) GELU, matching torch.nn.GELU default
    return 0.5 * x * (1.0 + lax.erf(x * 0.7071067811865476))


# ------------------------------- Pallas kernels ------------------------------

def embed_kernel(p_ref, w_ref, b_ref, cls_ref, pos_ref, o_ref):
    # p_ref: (1, Np, C*p*p)   w_ref: (C*p*p, D) bf16   b_ref: (1, D)
    # cls_ref: (1, 1, D)      pos_ref: (1, N, D)       o_ref: (1, N, D)
    tok = jnp.dot(p_ref[0].astype(jnp.bfloat16), w_ref[...],
                  preferred_element_type=jnp.float32)
    tok = tok + b_ref[...].astype(jnp.float32)                       # (Np, D)
    pos = pos_ref[0].astype(jnp.float32)                             # (N, D)
    n_patch = tok.shape[0]
    cls_row = cls_ref[0].astype(jnp.float32) + pos[0:1, :]           # (1, D)
    o_ref[0, 0:1, :] = cls_row.astype(o_ref.dtype)
    o_ref[0, 1:1 + n_patch, :] = (tok + pos[1:1 + n_patch, :]).astype(o_ref.dtype)


def attn_block_kernel(x_ref, g_ref, b_ref, wqkv_ref, bqkv_ref, wproj_ref, bproj_ref,
                      o_ref, *, num_heads, head_dim, eps):
    # x_ref: (1, N, D); weights bf16; o_ref: (1, N, D) = x + proj(attn(LN(x)))
    x = x_ref[0].astype(jnp.float32)                                 # (N, D)
    n_tok = x.shape[0]
    D = num_heads * head_dim
    scale = head_dim ** -0.5

    h = _layernorm(x, g_ref, b_ref, eps)
    qkv = jnp.dot(h.astype(jnp.bfloat16), wqkv_ref[...],
                  preferred_element_type=jnp.float32)
    qkv = qkv + bqkv_ref[...].astype(jnp.float32)                    # (N, 3D)

    # start the accumulator at the projection bias (added exactly once)
    acc = jnp.broadcast_to(bproj_ref[...].astype(jnp.float32), (n_tok, D))

    # TODO(synk): at real EVA sizes use a grid axis over heads / flash-style
    # KV tiling; num_heads is tiny here, so a static unroll keeps the fusion.
    for hd in range(num_heads):
        lo, hi = hd * head_dim, (hd + 1) * head_dim
        q = qkv[:, lo:hi] * scale
        k = qkv[:, D + lo:D + hi]
        v = qkv[:, 2 * D + lo:2 * D + hi]
        # contract over head_dim directly (no k.T materialization)
        s = lax.dot_general(q.astype(jnp.bfloat16), k.astype(jnp.bfloat16),
                            (((1,), (1,)), ((), ())),
                            preferred_element_type=jnp.float32)       # (N, N)
        m = jnp.max(s, axis=-1, keepdims=True)
        p = jnp.exp(s - m)
        inv = pl.reciprocal(jnp.sum(p, axis=-1, keepdims=True), approx=True)
        p = p * inv
        o_h = jnp.dot(p.astype(jnp.bfloat16), v.astype(jnp.bfloat16),
                      preferred_element_type=jnp.float32)             # (N, Dh)
        # fold the per-head output straight through its slice of proj_w:
        acc = acc + jnp.dot(o_h.astype(jnp.bfloat16), wproj_ref[lo:hi, :],
                            preferred_element_type=jnp.float32)

    o_ref[0] = (x + acc).astype(o_ref.dtype)


def mlp_block_kernel(x_ref, g_ref, b_ref, w1_ref, b1_ref, w2_ref, b2_ref, o_ref, *, eps):
    # o = x + fc2(gelu(fc1(LN(x))))
    x = x_ref[0].astype(jnp.float32)                                 # (N, D)
    h = _layernorm(x, g_ref, b_ref, eps)
    a = jnp.dot(h.astype(jnp.bfloat16), w1_ref[...],
                preferred_element_type=jnp.float32)
    a = _gelu_exact(a + b1_ref[...].astype(jnp.float32))
    y = jnp.dot(a.astype(jnp.bfloat16), w2_ref[...],
                preferred_element_type=jnp.float32)
    y = y + b2_ref[...].astype(jnp.float32)
    o_ref[0] = (x + y).astype(o_ref.dtype)


def head_kernel(x_ref, g_ref, b_ref, w_ref, bh_ref, o_ref, *, eps):
    # final LN on CLS rows -> linear head -> L2 normalize (F.normalize, dim=-1)
    x = x_ref[...].astype(jnp.float32)                               # (B, D)
    h = _layernorm(x, g_ref, b_ref, eps)
    f = jnp.dot(h.astype(jnp.bfloat16), w_ref[...],
                preferred_element_type=jnp.float32)
    f = f + bh_ref[...].astype(jnp.float32)                          # (B, E)
    n = jnp.sqrt(jnp.sum(f * f, axis=-1, keepdims=True))
    o_ref[...] = (f / jnp.maximum(n, 1e-12)).astype(o_ref.dtype)


# ----------------------------- pallas_call wrappers --------------------------

_PAR = pltpu.CompilerParams(dimension_semantics=("parallel",))


def p_embed(patches, w, b, cls_tok, pos):
    B, Np, Cpp = patches.shape
    D = w.shape[1]
    N = pos.shape[1]
    return pl.pallas_call(
        embed_kernel,
        out_shape=jax.ShapeDtypeStruct((B, N, D), jnp.float32),
        grid=(B,),
        in_specs=[
            pl.BlockSpec((1, Np, Cpp), lambda bi: (bi, 0, 0)),
            pl.BlockSpec((Cpp, D), lambda bi: (0, 0)),
            pl.BlockSpec((1, D), lambda bi: (0, 0)),
            pl.BlockSpec((1, 1, D), lambda bi: (0, 0, 0)),
            pl.BlockSpec((1, N, D), lambda bi: (0, 0, 0)),
        ],
        out_specs=pl.BlockSpec((1, N, D), lambda bi: (bi, 0, 0)),
        compiler_params=_PAR,
    )(patches, w, b, cls_tok, pos)


def p_attn_block(x, blk, *, num_heads, head_dim, eps):
    B, N, D = x.shape
    kern = functools.partial(attn_block_kernel, num_heads=num_heads,
                             head_dim=head_dim, eps=eps)
    return pl.pallas_call(
        kern,
        out_shape=jax.ShapeDtypeStruct((B, N, D), x.dtype),
        grid=(B,),
        in_specs=[
            pl.BlockSpec((1, N, D), lambda bi: (bi, 0, 0)),
            pl.BlockSpec((1, D), lambda bi: (0, 0)),
            pl.BlockSpec((1, D), lambda bi: (0, 0)),
            pl.BlockSpec((D, 3 * D), lambda bi: (0, 0)),
            pl.BlockSpec((1, 3 * D), lambda bi: (0, 0)),
            pl.BlockSpec((D, D), lambda bi: (0, 0)),
            pl.BlockSpec((1, D), lambda bi: (0, 0)),
        ],
        out_specs=pl.BlockSpec((1, N, D), lambda bi: (bi, 0, 0)),
        compiler_params=_PAR,
    )(x, blk["ln1_g"], blk["ln1_b"], blk["qkv_w"], blk["qkv_b"],
      blk["proj_w"], blk["proj_b"])


def p_mlp_block(x, blk, *, eps):
    B, N, D = x.shape
    hidden = blk["fc1_w"].shape[1]
    kern = functools.partial(mlp_block_kernel, eps=eps)
    return pl.pallas_call(
        kern,
        out_shape=jax.ShapeDtypeStruct((B, N, D), x.dtype),
        grid=(B,),
        in_specs=[
            pl.BlockSpec((1, N, D), lambda bi: (bi, 0, 0)),
            pl.BlockSpec((1, D), lambda bi: (0, 0)),
            pl.BlockSpec((1, D), lambda bi: (0, 0)),
            pl.BlockSpec((D, hidden), lambda bi: (0, 0)),
            pl.BlockSpec((1, hidden), lambda bi: (0, 0)),
            pl.BlockSpec((hidden, D), lambda bi: (0, 0)),
            pl.BlockSpec((1, D), lambda bi: (0, 0)),
        ],
        out_specs=pl.BlockSpec((1, N, D), lambda bi: (bi, 0, 0)),
        compiler_params=_PAR,
    )(x, blk["ln2_g"], blk["ln2_b"], blk["fc1_w"], blk["fc1_b"],
      blk["fc2_w"], blk["fc2_b"])


def p_head(cls_rows, g, b, w, bh, *, eps):
    B, D = cls_rows.shape
    E = w.shape[1]
    kern = functools.partial(head_kernel, eps=eps)
    vmem = pl.BlockSpec(memory_space=pltpu.MemorySpace.VMEM)
    return pl.pallas_call(
        kern,
        out_shape=jax.ShapeDtypeStruct((B, E), jnp.float32),
        in_specs=[vmem, vmem, vmem, vmem, vmem],
        out_specs=vmem,
    )(cls_rows, g, b, w, bh)


# ------------------------------ model / params ------------------------------

# Small-shape config consistent with EVAVisionTransformer defaults:
#   qkv_bias=True (q/v bias learnable, k bias fixed 0), pre-norm blocks,
#   no layer-scale / rope / xattn / swiglu / subln / postnorm, patch_dropout=0,
#   use_mean_pooling=False -> final LayerNorm, CLS token, linear head to
#   embed_dim, then F.normalize(dim=-1).
# Dimensions chosen lane-dense (D = embed_dim = 128, head_width = 64 as in EVA).
CFG = dict(
    batch=2, in_chans=3, image_size=16, patch_size=8,
    width=128, head_width=64, mlp_ratio=4.0, layers=2, embed_dim=128,
)


def init_params(key, cfg):
    D = cfg["width"]
    hidden = int(D * cfg["mlp_ratio"])
    C = cfg["in_chans"]
    p = cfg["patch_size"]
    np_ = (cfg["image_size"] // p) ** 2
    out_dim = cfg["embed_dim"]

    keys = jax.random.split(key, 64)
    ki = iter(range(64))

    def nrm(shape, std=0.02):
        return jax.random.normal(keys[next(ki)], shape, jnp.float32) * std

    params = {
        # patch embed conv (D, C, p, p) flattened to (C*p*p, D) matmul weight
        "patch_w": nrm((C * p * p, D)),
        "patch_b": jnp.zeros((D,), jnp.float32),
        "cls_token": nrm((1, 1, D)),
        "pos_embed": nrm((1, np_ + 1, D)),
        "blocks": [],
        "norm_g": jnp.ones((D,), jnp.float32),
        "norm_b": jnp.zeros((D,), jnp.float32),
        "head_w": nrm((D, out_dim)),
        "head_b": jnp.zeros((out_dim,), jnp.float32),
    }
    for _ in range(cfg["layers"]):
        params["blocks"].append({
            "ln1_g": jnp.ones((D,), jnp.float32), "ln1_b": jnp.zeros((D,), jnp.float32),
            "qkv_w": nrm((D, 3 * D)),
            "q_bias": nrm((D,)),           # EVA: learnable q/v bias, k bias fixed 0
            "v_bias": nrm((D,)),
            "proj_w": nrm((D, D)), "proj_b": jnp.zeros((D,), jnp.float32),
            "ln2_g": jnp.ones((D,), jnp.float32), "ln2_b": jnp.zeros((D,), jnp.float32),
            "fc1_w": nrm((D, hidden)), "fc1_b": jnp.zeros((hidden,), jnp.float32),
            "fc2_w": nrm((hidden, D)), "fc2_b": jnp.zeros((D,), jnp.float32),
        })
    return params


def prepare_params(params):
    """One-time param prep: bf16 matmul weights, (1, d) bias rows, and the
    qkv_bias = concat(q_bias, 0, v_bias) hoisted out of the layer loop."""
    D = params["norm_g"].shape[0]
    fp = {
        "patch_w": params["patch_w"].astype(jnp.bfloat16),
        "patch_b": params["patch_b"].reshape(1, -1),
        "cls_token": params["cls_token"],
        "pos_embed": params["pos_embed"],
        "norm_g": params["norm_g"].reshape(1, -1),
        "norm_b": params["norm_b"].reshape(1, -1),
        "head_w": params["head_w"].astype(jnp.bfloat16),
        "head_b": params["head_b"].reshape(1, -1),
        "blocks": [],
    }
    for blk in params["blocks"]:
        qkv_bias = jnp.concatenate(
            [blk["q_bias"], jnp.zeros((D,), jnp.float32), blk["v_bias"]], axis=0)
        fp["blocks"].append({
            "ln1_g": blk["ln1_g"].reshape(1, -1), "ln1_b": blk["ln1_b"].reshape(1, -1),
            "qkv_w": blk["qkv_w"].astype(jnp.bfloat16),
            "qkv_b": qkv_bias.reshape(1, -1),
            "proj_w": blk["proj_w"].astype(jnp.bfloat16),
            "proj_b": blk["proj_b"].reshape(1, -1),
            "ln2_g": blk["ln2_g"].reshape(1, -1), "ln2_b": blk["ln2_b"].reshape(1, -1),
            "fc1_w": blk["fc1_w"].astype(jnp.bfloat16), "fc1_b": blk["fc1_b"].reshape(1, -1),
            "fc2_w": blk["fc2_w"].astype(jnp.bfloat16), "fc2_b": blk["fc2_b"].reshape(1, -1),
        })
    return fp


def eva_vision_forward(fp, image, cfg):
    """image: (B, C, H, W) float32 NCHW.  Returns (B, embed_dim) L2-normalized."""
    B, C, Hi, Wi = image.shape
    p = cfg["patch_size"]
    D = cfg["width"]
    Dh = cfg["head_width"]
    H = D // Dh
    gh, gw = Hi // p, Wi // p
    Np = gh * gw
    eps = 1e-6   # EVA-CLIP uses partial(LayerNorm, eps=1e-6)

    # im2col layout shuffle (glue): (B, Np, C*p*p) in (C, ph, pw) order to
    # match torch.nn.Conv2d weight flattening.
    patches = image.reshape(B, C, gh, p, gw, p).transpose(0, 2, 4, 1, 3, 5)
    patches = patches.reshape(B, Np, C * p * p)

    # fused: patch-embed matmul + CLS prepend + pos-embed add
    x = p_embed(patches, fp["patch_w"], fp["patch_b"], fp["cls_token"],
                fp["pos_embed"])                                      # (B, N, D)
    # patch_dropout=0.0 and drop_path=0.0 are identity at inference; omitted.

    for blk in fp["blocks"]:
        x = p_attn_block(x, blk, num_heads=H, head_dim=Dh, eps=eps)
        x = p_mlp_block(x, blk, eps=eps)

    cls_rows = x[:, 0, :]                                             # (B, D)
    feats = p_head(cls_rows, fp["norm_g"], fp["norm_b"],
                   fp["head_w"], fp["head_b"], eps=eps)               # (B, E)
    return feats


# ----------------------------------- main ------------------------------------

if __name__ == "__main__":
    key = jax.random.PRNGKey(0)
    pkey, xkey = jax.random.split(key)
    params = init_params(pkey, CFG)
    fp = prepare_params(params)
    image = jax.random.normal(
        xkey, (CFG["batch"], CFG["in_chans"], CFG["image_size"], CFG["image_size"]),
        jnp.float32)

    fwd = jax.jit(lambda fp_, img_: eva_vision_forward(fp_, img_, CFG))
    out = jax.block_until_ready(fwd(fp, image))

    assert out.shape == (CFG["batch"], CFG["embed_dim"])
    norms = jnp.linalg.norm(out, axis=-1)
    assert bool(jnp.all(jnp.abs(norms - 1.0) < 1e-3))
    print("KERNEL_OK")
</pallas_src>

<mosaic_0001>
module attributes {stable_mosaic.version = 11 : i64} {
  func.func @embed_kernel(%arg0: i32, %arg1: memref<1x4x192xf32, #tpu.memory_space<vmem>>, %arg2: memref<192x128xbf16, #tpu.memory_space<vmem>>, %arg3: memref<1x128xf32, #tpu.memory_space<vmem>>, %arg4: memref<1x1x128xf32, #tpu.memory_space<vmem>>, %arg5: memref<1x5x128xf32, #tpu.memory_space<vmem>>, %arg6: memref<1x5x128xf32, #tpu.memory_space<vmem>>) attributes {dimension_semantics = [#tpu.dimension_semantics<parallel>], iteration_bounds = array<i64: 2>, scalar_prefetch = 0 : i64, scratch_operands = 0 : i64, tpu.core_type = #tpu.core_type<tc>, window_params = [{transform_indices = @transform_0, window_bounds = array<i64: 1, 4, 192>}, {pipeline_mode = #tpu.pipeline_mode<synchronous>, transform_indices = @transform_1, window_bounds = array<i64: 192, 128>}, {pipeline_mode = #tpu.pipeline_mode<synchronous>, transform_indices = @transform_2, window_bounds = array<i64: 1, 128>}, {pipeline_mode = #tpu.pipeline_mode<synchronous>, transform_indices = @transform_3, window_bounds = array<i64: 1, 1, 128>}, {pipeline_mode = #tpu.pipeline_mode<synchronous>, transform_indices = @transform_4, window_bounds = array<i64: 1, 5, 128>}, {transform_indices = @transform_5, window_bounds = array<i64: 1, 5, 128>}]} {
    %c0 = arith.constant 0 : index
    %c0_0 = arith.constant 0 : index
    %c0_1 = arith.constant 0 : index
    %0 = vector.load %arg1[%c0, %c0_0, %c0_1] : memref<1x4x192xf32, #tpu.memory_space<vmem>>, vector<1x4x192xf32>
    %1 = vector.shape_cast %0 : vector<1x4x192xf32> to vector<4x192xf32>
    %2 = arith.truncf %1 : vector<4x192xf32> to vector<4x192xbf16>
    %c0_2 = arith.constant 0 : index
    %c0_3 = arith.constant 0 : index
    %3 = vector.load %arg2[%c0_2, %c0_3] : memref<192x128xbf16, #tpu.memory_space<vmem>>, vector<192x128xbf16>
    %cst = arith.constant dense<0.000000e+00> : vector<4x128xf32>
    %4 = tpu.matmul %2, %3, %cst {dimension_numbers = #tpu.dot_dimension_numbers<[1], [0], [0], [1], [0, 0, 1, 1], [], []>} : vector<4x192xbf16>, vector<192x128xbf16>, vector<4x128xf32> -> vector<4x128xf32>
    %c0_4 = arith.constant 0 : index
    %c0_5 = arith.constant 0 : index
    %5 = vector.load %arg3[%c0_4, %c0_5] : memref<1x128xf32, #tpu.memory_space<vmem>>, vector<1x128xf32>
    %6 = vector.broadcast %5 : vector<1x128xf32> to vector<4x128xf32>
    %7 = arith.addf %4, %6 : vector<4x128xf32>
    %c0_6 = arith.constant 0 : index
    %c0_7 = arith.constant 0 : index
    %c0_8 = arith.constant 0 : index
    %8 = vector.load %arg5[%c0_6, %c0_7, %c0_8] : memref<1x5x128xf32, #tpu.memory_space<vmem>>, vector<1x5x128xf32>
    %9 = vector.shape_cast %8 : vector<1x5x128xf32> to vector<5x128xf32>
    %c0_9 = arith.constant 0 : index
    %c0_10 = arith.constant 0 : index
    %c0_11 = arith.constant 0 : index
    %10 = vector.load %arg4[%c0_9, %c0_10, %c0_11] : memref<1x1x128xf32, #tpu.memory_space<vmem>>, vector<1x1x128xf32>
    %11 = vector.shape_cast %10 : vector<1x1x128xf32> to vector<1x128xf32>
    %12 = vector.extract_strided_slice %9 {offsets = [0, 0], sizes = [1, 128], strides = [1, 1]} : vector<5x128xf32> to vector<1x128xf32>
    %13 = arith.addf %11, %12 : vector<1x128xf32>
    %c0_12 = arith.constant 0 : index
    %c0_13 = arith.constant 0 : index
    %c0_14 = arith.constant 0 : index
    %14 = vector.load %arg6[%c0_12, %c0_13, %c0_14] : memref<1x5x128xf32, #tpu.memory_space<vmem>>, vector<1x1x128xf32>
    %15 = vector.shape_cast %14 : vector<1x1x128xf32> to vector<1x128xf32>
    %16 = vector.shape_cast %13 : vector<1x128xf32> to vector<1x1x128xf32>
    tpu.vector_store %arg6[%c0_12, %c0_13, %c0_14], %16 {strides = array<i32>} : memref<1x5x128xf32, #tpu.memory_space<vmem>>, vector<1x1x128xf32>,
    %17 = vector.extract_strided_slice %9 {offsets = [1, 0], sizes = [4, 128], strides = [1, 1]} : vector<5x128xf32> to vector<4x128xf32>
    %18 = arith.addf %7, %17 : vector<4x128xf32>
    %c0_15 = arith.constant 0 : index
    %c1 = arith.constant 1 : index
    %c0_16 = arith.constant 0 : index
    %19 = vector.load %arg6[%c0_15, %c1, %c0_16] : memref<1x5x128xf32, #tpu.memory_space<vmem>>, vector<1x4x128xf32>
    %20 = vector.shape_cast %19 : vector<1x4x128xf32> to vector<4x128xf32>
    %21 = vector.shape_cast %18 : vector<4x128xf32> to vector<1x4x128xf32>
    tpu.vector_store %arg6[%c0_15, %c1, %c0_16], %21 {strides = array<i32>} : memref<1x5x128xf32, #tpu.memory_space<vmem>>, vector<1x4x128xf32>,
    return
  }
  func.func @transform_0(%arg0: i32) -> (i32, i32, i32) {
    %c0_i32 = arith.constant 0 : i32
    %c0_i32_0 = arith.constant 0 : i32
    %c0_i32_1 = arith.constant 0 : i32
    return %arg0, %c0_i32, %c0_i32_0 : i32, i32, i32
  }
  func.func @transform_1(%arg0: i32) -> (i32, i32) {
    %c0_i32 = arith.constant 0 : i32
    %c0_i32_0 = arith.constant 0 : i32
    %c0_i32_1 = arith.constant 0 : i32
    return %c0_i32, %c0_i32_0 : i32, i32
  }
  func.func @transform_2(%arg0: i32) -> (i32, i32) {
    %c0_i32 = arith.constant 0 : i32
    %c0_i32_0 = arith.constant 0 : i32
    %c0_i32_1 = arith.constant 0 : i32
    return %c0_i32, %c0_i32_0 : i32, i32
  }
  func.func @transform_3(%arg0: i32) -> (i32, i32, i32) {
    %c0_i32 = arith.constant 0 : i32
    %c0_i32_0 = arith.constant 0 : i32
    %c0_i32_1 = arith.constant 0 : i32
    %c0_i32_2 = arith.constant 0 : i32
    return %c0_i32, %c0_i32_0, %c0_i32_1 : i32, i32, i32
  }
  func.func @transform_4(%arg0: i32) -> (i32, i32, i32) {
    %c0_i32 = arith.constant 0 : i32
    %c0_i32_0 = arith.constant 0 : i32
    %c0_i32_1 = arith.constant 0 : i32
    %c0_i32_2 = arith.constant 0 : i32
    return %c0_i32, %c0_i32_0, %c0_i32_1 : i32, i32, i32
  }
  func.func @transform_5(%arg0: i32) -> (i32, i32, i32) {
    %c0_i32 = arith.constant 0 : i32
    %c0_i32_0 = arith.constant 0 : i32
    %c0_i32_1 = arith.constant 0 : i32
    return %arg0, %c0_i32, %c0_i32_0 : i32, i32, i32
  }
}

module attributes {stable_mosaic.version = 11 : i64} {
  func.func @attn_block_kernel(%arg0: i32, %arg1: memref<1x5x128xf32, #tpu.memory_space<vmem>>, %arg2: memref<1x128xf32, #tpu.memory_space<vmem>>, %arg3: memref<1x128xf32, #tpu.memory_space<vmem>>, %arg4: memref<128x384xbf16, #tpu.memory_space<vmem>>, %arg5: memref<1x384xf32, #tpu.memory_space<vmem>>, %arg6: memref<128x128xbf16, #tpu.memory_space<vmem>>, %arg7: memref<1x128xf32, #tpu.memory_space<vmem>>, %arg8: memref<1x5x128xf32, #tpu.memory_space<vmem>>) attributes {dimension_semantics = [#tpu.dimension_semantics<parallel>], iteration_bounds = array<i64: 2>, scalar_prefetch = 0 : i64, scratch_operands = 0 : i64, tpu.core_type = #tpu.core_type<tc>, window_params = [{transform_indices = @transform_0, window_bounds = array<i64: 1, 5, 128>}, {pipeline_mode = #tpu.pipeline_mode<synchronous>, transform_indices = @transform_1, window_bounds = array<i64: 1, 128>}, {pipeline_mode = #tpu.pipeline_mode<synchronous>, transform_indices = @transform_2, window_bounds = array<i64: 1, 128>}, {pipeline_mode = #tpu.pipeline_mode<synchronous>, transform_indices = @transform_3, window_bounds = array<i64: 128, 384>}, {pipeline_mode = #tpu.pipeline_mode<synchronous>, transform_indices = @transform_4, window_bounds = array<i64: 1, 384>}, {pipeline_mode = #tpu.pipeline_mode<synchronous>, transform_indices = @transform_5, window_bounds = array<i64: 128, 128>}, {pipeline_mode = #tpu.pipeline_mode<synchronous>, transform_indices = @transform_6, window_bounds = array<i64: 1, 128>}, {transform_indices = @transform_7, window_bounds = array<i64: 1, 5, 128>}]} {
    %c0 = arith.constant 0 : index
    %c0_0 = arith.constant 0 : index
    %c0_1 = arith.constant 0 : index
    %0 = vector.load %arg1[%c0, %c0_0, %c0_1] : memref<1x5x128xf32, #tpu.memory_space<vmem>>, vector<1x5x128xf32>
    %1 = vector.shape_cast %0 : vector<1x5x128xf32> to vector<5x128xf32>
    %cst = arith.constant dense<0.000000e+00> : vector<5xf32>
    %2 = vector.multi_reduction <add>, %1, %cst [1] : vector<5x128xf32> to vector<5xf32>
    %3 = vector.shape_cast %2 : vector<5xf32> to vector<5x1xf32>
    %cst_2 = arith.constant 1.280000e+02 : f32
    %4 = vector.broadcast %cst_2 : f32 to vector<5x1xf32>
    %5 = arith.divf %3, %4 : vector<5x1xf32>
    %6 = vector.broadcast %5 : vector<5x1xf32> to vector<5x128xf32>
    %7 = arith.subf %1, %6 : vector<5x128xf32>
    %8 = arith.mulf %7, %7 : vector<5x128xf32>
    %cst_3 = arith.constant dense<0.000000e+00> : vector<5xf32>
    %9 = vector.multi_reduction <add>, %8, %cst_3 [1] : vector<5x128xf32> to vector<5xf32>
    %10 = vector.shape_cast %9 : vector<5xf32> to vector<5x1xf32>
    %cst_4 = arith.constant 1.280000e+02 : f32
    %11 = vector.broadcast %cst_4 : f32 to vector<5x1xf32>
    %12 = arith.divf %10, %11 : vector<5x1xf32>
    %13 = vector.broadcast %5 : vector<5x1xf32> to vector<5x128xf32>
    %14 = arith.subf %1, %13 : vector<5x128xf32>
    %cst_5 = arith.constant 9.99999997E-7 : f32
    %15 = vector.broadcast %cst_5 : f32 to vector<5x1xf32>
    %16 = arith.addf %12, %15 : vector<5x1xf32>
    %17 = math.rsqrt %16 : vector<5x1xf32>
    %18 = vector.broadcast %17 : vector<5x1xf32> to vector<5x128xf32>
    %19 = arith.mulf %14, %18 : vector<5x128xf32>
    %c0_6 = arith.constant 0 : index
    %c0_7 = arith.constant 0 : index
    %20 = vector.load %arg2[%c0_6, %c0_7] : memref<1x128xf32, #tpu.memory_space<vmem>>, vector<1x128xf32>
    %21 = vector.broadcast %20 : vector<1x128xf32> to vector<5x128xf32>
    %22 = arith.mulf %19, %21 : vector<5x128xf32>
    %c0_8 = arith.constant 0 : index
    %c0_9 = arith.constant 0 : index
    %23 = vector.load %arg3[%c0_8, %c0_9] : memref<1x128xf32, #tpu.memory_space<vmem>>, vector<1x128xf32>
    %24 = vector.broadcast %23 : vector<1x128xf32> to vector<5x128xf32>
    %25 = arith.addf %22, %24 : vector<5x128xf32>
    %26 = arith.truncf %25 : vector<5x128xf32> to vector<5x128xbf16>
    %c0_10 = arith.constant 0 : index
    %c0_11 = arith.constant 0 : index
    %27 = vector.load %arg4[%c0_10, %c0_11] : memref<128x384xbf16, #tpu.memory_space<vmem>>, vector<128x384xbf16>
    %cst_12 = arith.constant dense<0.000000e+00> : vector<5x384xf32>
    %28 = tpu.matmul %26, %27, %cst_12 {dimension_numbers = #tpu.dot_dimension_numbers<[1], [0], [0], [1], [0, 0, 1, 1], [], []>} : vector<5x128xbf16>, vector<128x384xbf16>, vector<5x384xf32> -> vector<5x384xf32>
    %c0_13 = arith.constant 0 : index
    %c0_14 = arith.constant 0 : index
    %29 = vector.load %arg5[%c0_13, %c0_14] : memref<1x384xf32, #tpu.memory_space<vmem>>, vector<1x384xf32>
    %30 = vector.broadcast %29 : vector<1x384xf32> to vector<5x384xf32>
    %31 = arith.addf %28, %30 : vector<5x384xf32>
    %c0_15 = arith.constant 0 : index
    %c0_16 = arith.constant 0 : index
    %32 = vector.load %arg7[%c0_15, %c0_16] : memref<1x128xf32, #tpu.memory_space<vmem>>, vector<1x128xf32>
    %33 = vector.shape_cast %32 : vector<1x128xf32> to vector<1x128xf32>
    %34 = vector.broadcast %33 : vector<1x128xf32> to vector<5x128xf32>
    %35 = vector.extract_strided_slice %31 {offsets = [0, 0], sizes = [5, 64], strides = [1, 1]} : vector<5x384xf32> to vector<5x64xf32>
    %cst_17 = arith.constant 1.250000e-01 : f32
    %36 = vector.broadcast %cst_17 : f32 to vector<5x64xf32>
    %37 = arith.mulf %35, %36 : vector<5x64xf32>
    %38 = vector.extract_strided_slice %31 {offsets = [0, 128], sizes = [5, 64], strides = [1, 1]} : vector<5x384xf32> to vector<5x64xf32>
    %39 = vector.extract_strided_slice %31 {offsets = [0, 256], sizes = [5, 64], strides = [1, 1]} : vector<5x384xf32> to vector<5x64xf32>
    %40 = arith.truncf %37 : vector<5x64xf32> to vector<5x64xbf16>
    %41 = arith.truncf %38 : vector<5x64xf32> to vector<5x64xbf16>
    %cst_18 = arith.constant dense<0.000000e+00> : vector<5x5xf32>
    %42 = tpu.matmul %40, %41, %cst_18 {dimension_numbers = #tpu.dot_dimension_numbers<[1], [1], [0], [0], [0, 0, 1, 0], [], []>} : vector<5x64xbf16>, vector<5x64xbf16>, vector<5x5xf32> -> vector<5x5xf32>
    %cst_19 = arith.constant dense<0xFF800000> : vector<5xf32>
    %43 = vector.multi_reduction <maximumf>, %42, %cst_19 [1] : vector<5x5xf32> to vector<5xf32>
    %44 = vector.shape_cast %43 : vector<5xf32> to vector<5x1xf32>
    %45 = vector.broadcast %44 : vector<5x1xf32> to vector<5x5xf32>
    %46 = arith.subf %42, %45 : vector<5x5xf32>
    %47 = math.exp %46 : vector<5x5xf32>
    %cst_20 = arith.constant dense<0.000000e+00> : vector<5xf32>
    %48 = vector.multi_reduction <add>, %47, %cst_20 [1] : vector<5x5xf32> to vector<5xf32>
    %49 = vector.shape_cast %48 : vector<5xf32> to vector<5x1xf32>
    %50 = tpu.reciprocal %49 {approx = true} : vector<5x1xf32> -> vector<5x1xf32>
    %51 = vector.broadcast %50 : vector<5x1xf32> to vector<5x5xf32>
    %52 = arith.mulf %47, %51 : vector<5x5xf32>
    %53 = arith.truncf %52 : vector<5x5xf32> to vector<5x5xbf16>
    %54 = arith.truncf %39 : vector<5x64xf32> to vector<5x64xbf16>
    %cst_21 = arith.constant dense<0.000000e+00> : vector<5x64xf32>
    %55 = tpu.matmul %53, %54, %cst_21 {dimension_numbers = #tpu.dot_dimension_numbers<[1], [0], [0], [1], [0, 0, 1, 1], [], []>} : vector<5x5xbf16>, vector<5x64xbf16>, vector<5x64xf32> -> vector<5x64xf32>
    %56 = arith.truncf %55 : vector<5x64xf32> to vector<5x64xbf16>
    %c0_22 = arith.constant 0 : index
    %c0_23 = arith.constant 0 : index
    %57 = vector.load %arg6[%c0_22, %c0_23] : memref<128x128xbf16, #tpu.memory_space<vmem>>, vector<64x128xbf16>
    %cst_24 = arith.constant dense<0.000000e+00> : vector<5x128xf32>
    %58 = tpu.matmul %56, %57, %cst_24 {dimension_numbers = #tpu.dot_dimension_numbers<[1], [0], [0], [1], [0, 0, 1, 1], [], []>} : vector<5x64xbf16>, vector<64x128xbf16>, vector<5x128xf32> -> vector<5x128xf32>
    %59 = arith.addf %34, %58 : vector<5x128xf32>
    %60 = vector.extract_strided_slice %31 {offsets = [0, 64], sizes = [5, 64], strides = [1, 1]} : vector<5x384xf32> to vector<5x64xf32>
    %cst_25 = arith.constant 1.250000e-01 : f32
    %61 = vector.broadcast %cst_25 : f32 to vector<5x64xf32>
    %62 = arith.mulf %60, %61 : vector<5x64xf32>
    %63 = vector.extract_strided_slice %31 {offsets = [0, 192], sizes = [5, 64], strides = [1, 1]} : vector<5x384xf32> to vector<5x64xf32>
    %64 = vector.extract_strided_slice %31 {offsets = [0, 320], sizes = [5, 64], strides = [1, 1]} : vector<5x384xf32> to vector<5x64xf32>
    %65 = arith.truncf %62 : vector<5x64xf32> to vector<5x64xbf16>
    %66 = arith.truncf %63 : vector<5x64xf32> to vector<5x64xbf16>
    %cst_26 = arith.constant dense<0.000000e+00> : vector<5x5xf32>
    %67 = tpu.matmul %65, %66, %cst_26 {dimension_numbers = #tpu.dot_dimension_numbers<[1], [1], [0], [0], [0, 0, 1, 0], [], []>} : vector<5x64xbf16>, vector<5x64xbf16>, vector<5x5xf32> -> vector<5x5xf32>
    %cst_27 = arith.constant dense<0xFF800000> : vector<5xf32>
    %68 = vector.multi_reduction <maximumf>, %67, %cst_27 [1] : vector<5x5xf32> to vector<5xf32>
    %69 = vector.shape_cast %68 : vector<5xf32> to vector<5x1xf32>
    %70 = vector.broadcast %69 : vector<5x1xf32> to vector<5x5xf32>
    %71 = arith.subf %67, %70 : vector<5x5xf32>
    %72 = math.exp %71 : vector<5x5xf32>
    %cst_28 = arith.constant dense<0.000000e+00> : vector<5xf32>
    %73 = vector.multi_reduction <add>, %72, %cst_28 [1] : vector<5x5xf32> to vector<5xf32>
    %74 = vector.shape_cast %73 : vector<5xf32> to vector<5x1xf32>
    %75 = tpu.reciprocal %74 {approx = true} : vector<5x1xf32> -> vector<5x1xf32>
    %76 = vector.broadcast %75 : vector<5x1xf32> to vector<5x5xf32>
    %77 = arith.mulf %72, %76 : vector<5x5xf32>
    %78 = arith.truncf %77 : vector<5x5xf32> to vector<5x5xbf16>
    %79 = arith.truncf %64 : vector<5x64xf32> to vector<5x64xbf16>
    %cst_29 = arith.constant dense<0.000000e+00> : vector<5x64xf32>
    %80 = tpu.matmul %78, %79, %cst_29 {dimension_numbers = #tpu.dot_dimension_numbers<[1], [0], [0], [1], [0, 0, 1, 1], [], []>} : vector<5x5xbf16>, vector<5x64xbf16>, vector<5x64xf32> -> vector<5x64xf32>
    %81 = arith.truncf %80 : vector<5x64xf32> to vector<5x64xbf16>
    %c64 = arith.constant 64 : index
    %c0_30 = arith.constant 0 : index
    %82 = vector.load %arg6[%c64, %c0_30] : memref<128x128xbf16, #tpu.memory_space<vmem>>, vector<64x128xbf16>
    %cst_31 = arith.constant dense<0.000000e+00> : vector<5x128xf32>
    %83 = tpu.matmul %81, %82, %cst_31 {dimension_numbers = #tpu.dot_dimension_numbers<[1], [0], [0], [1], [0, 0, 1, 1], [], []>} : vector<5x64xbf16>, vector<64x128xbf16>, vector<5x128xf32> -> vector<5x128xf32>
    %84 = arith.addf %59, %83 : vector<5x128xf32>
    %85 = arith.addf %1, %84 : vector<5x128xf32>
    %c0_32 = arith.constant 0 : index
    %c0_33 = arith.constant 0 : index
    %c0_34 = arith.constant 0 : index
    %86 = vector.load %arg8[%c0_32, %c0_33, %c0_34] : memref<1x5x128xf32, #tpu.memory_space<vmem>>, vector<1x5x128xf32>
    %87 = vector.shape_cast %86 : vector<1x5x128xf32> to vector<5x128xf32>
    %88 = vector.shape_cast %85 : vector<5x128xf32> to vector<1x5x128xf32>
    tpu.vector_store %arg8[%c0_32, %c0_33, %c0_34], %88 {strides = array<i32>} : memref<1x5x128xf32, #tpu.memory_space<vmem>>, vector<1x5x128xf32>,
    return
  }
  func.func @transform_0(%arg0: i32) -> (i32, i32, i32) {
    %c0_i32 = arith.constant 0 : i32
    %c0_i32_0 = arith.constant 0 : i32
    %c0_i32_1 = arith.constant 0 : i32
    return %arg0, %c0_i32, %c0_i32_0 : i32, i32, i32
  }
  func.func @transform_1(%arg0: i32) -> (i32, i32) {
    %c0_i32 = arith.constant 0 : i32
    %c0_i32_0 = arith.constant 0 : i32
    %c0_i32_1 = arith.constant 0 : i32
    return %c0_i32, %c0_i32_0 : i32, i32
  }
  func.func @transform_2(%arg0: i32) -> (i32, i32) {
    %c0_i32 = arith.constant 0 : i32
    %c0_i32_0 = arith.constant 0 : i32
    %c0_i32_1 = arith.constant 0 : i32
    return %c0_i32, %c0_i32_0 : i32, i32
  }
  func.func @transform_3(%arg0: i32) -> (i32, i32) {
    %c0_i32 = arith.constant 0 : i32
    %c0_i32_0 = arith.constant 0 : i32
    %c0_i32_1 = arith.constant 0 : i32
    return %c0_i32, %c0_i32_0 : i32, i32
  }
  func.func @transform_4(%arg0: i32) -> (i32, i32) {
    %c0_i32 = arith.constant 0 : i32
    %c0_i32_0 = arith.constant 0 : i32
    %c0_i32_1 = arith.constant 0 : i32
    return %c0_i32, %c0_i32_0 : i32, i32
  }
  func.func @transform_5(%arg0: i32) -> (i32, i32) {
    %c0_i32 = arith.constant 0 : i32
    %c0_i32_0 = arith.constant 0 : i32
    %c0_i32_1 = arith.constant 0 : i32
    return %c0_i32, %c0_i32_0 : i32, i32
  }
  func.func @transform_6(%arg0: i32) -> (i32, i32) {
    %c0_i32 = arith.constant 0 : i32
    %c0_i32_0 = arith.constant 0 : i32
    %c0_i32_1 = arith.constant 0 : i32
    return %c0_i32, %c0_i32_0 : i32, i32
  }
  func.func @transform_7(%arg0: i32) -> (i32, i32, i32) {
    %c0_i32 = arith.constant 0 : i32
    %c0_i32_0 = arith.constant 0 : i32
    %c0_i32_1 = arith.constant 0 : i32
    return %arg0, %c0_i32, %c0_i32_0 : i32, i32, i32
  }
}

module attributes {stable_mosaic.version = 11 : i64} {
  func.func @mlp_block_kernel(%arg0: i32, %arg1: memref<1x5x128xf32, #tpu.memory_space<vmem>>, %arg2: memref<1x128xf32, #tpu.memory_space<vmem>>, %arg3: memref<1x128xf32, #tpu.memory_space<vmem>>, %arg4: memref<128x512xbf16, #tpu.memory_space<vmem>>, %arg5: memref<1x512xf32, #tpu.memory_space<vmem>>, %arg6: memref<512x128xbf16, #tpu.memory_space<vmem>>, %arg7: memref<1x128xf32, #tpu.memory_space<vmem>>, %arg8: memref<1x5x128xf32, #tpu.memory_space<vmem>>) attributes {dimension_semantics = [#tpu.dimension_semantics<parallel>], iteration_bounds = array<i64: 2>, scalar_prefetch = 0 : i64, scratch_operands = 0 : i64, tpu.core_type = #tpu.core_type<tc>, window_params = [{transform_indices = @transform_0, window_bounds = array<i64: 1, 5, 128>}, {pipeline_mode = #tpu.pipeline_mode<synchronous>, transform_indices = @transform_1, window_bounds = array<i64: 1, 128>}, {pipeline_mode = #tpu.pipeline_mode<synchronous>, transform_indices = @transform_2, window_bounds = array<i64: 1, 128>}, {pipeline_mode = #tpu.pipeline_mode<synchronous>, transform_indices = @transform_3, window_bounds = array<i64: 128, 512>}, {pipeline_mode = #tpu.pipeline_mode<synchronous>, transform_indices = @transform_4, window_bounds = array<i64: 1, 512>}, {pipeline_mode = #tpu.pipeline_mode<synchronous>, transform_indices = @transform_5, window_bounds = array<i64: 512, 128>}, {pipeline_mode = #tpu.pipeline_mode<synchronous>, transform_indices = @transform_6, window_bounds = array<i64: 1, 128>}, {transform_indices = @transform_7, window_bounds = array<i64: 1, 5, 128>}]} {
    %c0 = arith.constant 0 : index
    %c0_0 = arith.constant 0 : index
    %c0_1 = arith.constant 0 : index
    %0 = vector.load %arg1[%c0, %c0_0, %c0_1] : memref<1x5x128xf32, #tpu.memory_space<vmem>>, vector<1x5x128xf32>
    %1 = vector.shape_cast %0 : vector<1x5x128xf32> to vector<5x128xf32>
    %cst = arith.constant dense<0.000000e+00> : vector<5xf32>
    %2 = vector.multi_reduction <add>, %1, %cst [1] : vector<5x128xf32> to vector<5xf32>
    %3 = vector.shape_cast %2 : vector<5xf32> to vector<5x1xf32>
    %cst_2 = arith.constant 1.280000e+02 : f32
    %4 = vector.broadcast %cst_2 : f32 to vector<5x1xf32>
    %5 = arith.divf %3, %4 : vector<5x1xf32>
    %6 = vector.broadcast %5 : vector<5x1xf32> to vector<5x128xf32>
    %7 = arith.subf %1, %6 : vector<5x128xf32>
    %8 = arith.mulf %7, %7 : vector<5x128xf32>
    %cst_3 = arith.constant dense<0.000000e+00> : vector<5xf32>
    %9 = vector.multi_reduction <add>, %8, %cst_3 [1] : vector<5x128xf32> to vector<5xf32>
    %10 = vector.shape_cast %9 : vector<5xf32> to vector<5x1xf32>
    %cst_4 = arith.constant 1.280000e+02 : f32
    %11 = vector.broadcast %cst_4 : f32 to vector<5x1xf32>
    %12 = arith.divf %10, %11 : vector<5x1xf32>
    %13 = vector.broadcast %5 : vector<5x1xf32> to vector<5x128xf32>
    %14 = arith.subf %1, %13 : vector<5x128xf32>
    %cst_5 = arith.constant 9.99999997E-7 : f32
    %15 = vector.broadcast %cst_5 : f32 to vector<5x1xf32>
    %16 = arith.addf %12, %15 : vector<5x1xf32>
    %17 = math.rsqrt %16 : vector<5x1xf32>
    %18 = vector.broadcast %17 : vector<5x1xf32> to vector<5x128xf32>
    %19 = arith.mulf %14, %18 : vector<5x128xf32>
    %c0_6 = arith.constant 0 : index
    %c0_7 = arith.constant 0 : index
    %20 = vector.load %arg2[%c0_6, %c0_7] : memref<1x128xf32, #tpu.memory_space<vmem>>, vector<1x128xf32>
    %21 = vector.broadcast %20 : vector<1x128xf32> to vector<5x128xf32>
    %22 = arith.mulf %19, %21 : vector<5x128xf32>
    %c0_8 = arith.constant 0 : index
    %c0_9 = arith.constant 0 : index
    %23 = vector.load %arg3[%c0_8, %c0_9] : memref<1x128xf32, #tpu.memory_space<vmem>>, vector<1x128xf32>
    %24 = vector.broadcast %23 : vector<1x128xf32> to vector<5x128xf32>
    %25 = arith.addf %22, %24 : vector<5x128xf32>
    %26 = arith.truncf %25 : vector<5x128xf32> to vector<5x128xbf16>
    %c0_10 = arith.constant 0 : index
    %c0_11 = arith.constant 0 : index
    %27 = vector.load %arg4[%c0_10, %c0_11] : memref<128x512xbf16, #tpu.memory_space<vmem>>, vector<128x512xbf16>
    %cst_12 = arith.constant dense<0.000000e+00> : vector<5x512xf32>
    %28 = tpu.matmul %26, %27, %cst_12 {dimension_numbers = #tpu.dot_dimension_numbers<[1], [0], [0], [1], [0, 0, 1, 1], [], []>} : vector<5x128xbf16>, vector<128x512xbf16>, vector<5x512xf32> -> vector<5x512xf32>
    %c0_13 = arith.constant 0 : index
    %c0_14 = arith.constant 0 : index
    %29 = vector.load %arg5[%c0_13, %c0_14] : memref<1x512xf32, #tpu.memory_space<vmem>>, vector<1x512xf32>
    %30 = vector.broadcast %29 : vector<1x512xf32> to vector<5x512xf32>
    %31 = arith.addf %28, %30 : vector<5x512xf32>
    %cst_15 = arith.constant 5.000000e-01 : f32
    %32 = vector.broadcast %cst_15 : f32 to vector<5x512xf32>
    %33 = arith.mulf %32, %31 : vector<5x512xf32>
    %cst_16 = arith.constant 0.707106769 : f32
    %34 = vector.broadcast %cst_16 : f32 to vector<5x512xf32>
    %35 = arith.mulf %31, %34 : vector<5x512xf32>
    %36 = math.erf %35 : vector<5x512xf32>
    %cst_17 = arith.constant 1.000000e+00 : f32
    %37 = vector.broadcast %cst_17 : f32 to vector<5x512xf32>
    %38 = arith.addf %37, %36 : vector<5x512xf32>
    %39 = arith.mulf %33, %38 : vector<5x512xf32>
    %40 = arith.truncf %39 : vector<5x512xf32> to vector<5x512xbf16>
    %c0_18 = arith.constant 0 : index
    %c0_19 = arith.constant 0 : index
    %41 = vector.load %arg6[%c0_18, %c0_19] : memref<512x128xbf16, #tpu.memory_space<vmem>>, vector<512x128xbf16>
    %cst_20 = arith.constant dense<0.000000e+00> : vector<5x128xf32>
    %42 = tpu.matmul %40, %41, %cst_20 {dimension_numbers = #tpu.dot_dimension_numbers<[1], [0], [0], [1], [0, 0, 1, 1], [], []>} : vector<5x512xbf16>, vector<512x128xbf16>, vector<5x128xf32> -> vector<5x128xf32>
    %c0_21 = arith.constant 0 : index
    %c0_22 = arith.constant 0 : index
    %43 = vector.load %arg7[%c0_21, %c0_22] : memref<1x128xf32, #tpu.memory_space<vmem>>, vector<1x128xf32>
    %44 = vector.broadcast %43 : vector<1x128xf32> to vector<5x128xf32>
    %45 = arith.addf %42, %44 : vector<5x128xf32>
    %46 = arith.addf %1, %45 : vector<5x128xf32>
    %c0_23 = arith.constant 0 : index
    %c0_24 = arith.constant 0 : index
    %c0_25 = arith.constant 0 : index
    %47 = vector.load %arg8[%c0_23, %c0_24, %c0_25] : memref<1x5x128xf32, #tpu.memory_space<vmem>>, vector<1x5x128xf32>
    %48 = vector.shape_cast %47 : vector<1x5x128xf32> to vector<5x128xf32>
    %49 = vector.shape_cast %46 : vector<5x128xf32> to vector<1x5x128xf32>
    tpu.vector_store %arg8[%c0_23, %c0_24, %c0_25], %49 {strides = array<i32>} : memref<1x5x128xf32, #tpu.memory_space<vmem>>, vector<1x5x128xf32>,
    return
  }
  func.func @transform_0(%arg0: i32) -> (i32, i32, i32) {
    %c0_i32 = arith.constant 0 : i32
    %c0_i32_0 = arith.constant 0 : i32
    %c0_i32_1 = arith.constant 0 : i32
    return %arg0, %c0_i32, %c0_i32_0 : i32, i32, i32
  }
  func.func @transform_1(%arg0: i32) -> (i32, i32) {
    %c0_i32 = arith.constant 0 : i32
    %c0_i32_0 = arith.constant 0 : i32
    %c0_i32_1 = arith.constant 0 : i32
    return %c0_i32, %c0_i32_0 : i32, i32
  }
  func.func @transform_2(%arg0: i32) -> (i32, i32) {
    %c0_i32 = arith.constant 0 : i32
    %c0_i32_0 = arith.constant 0 : i32
    %c0_i32_1 = arith.constant 0 : i32
    return %c0_i32, %c0_i32_0 : i32, i32
  }
  func.func @transform_3(%arg0: i32) -> (i32, i32) {
    %c0_i32 = arith.constant 0 : i32
    %c0_i32_0 = arith.constant 0 : i32
    %c0_i32_1 = arith.constant 0 : i32
    return %c0_i32, %c0_i32_0 : i32, i32
  }
  func.func @transform_4(%arg0: i32) -> (i32, i32) {
    %c0_i32 = arith.constant 0 : i32
    %c0_i32_0 = arith.constant 0 : i32
    %c0_i32_1 = arith.constant 0 : i32
    return %c0_i32, %c0_i32_0 : i32, i32
  }
  func.func @transform_5(%arg0: i32) -> (i32, i32) {
    %c0_i32 = arith.constant 0 : i32
    %c0_i32_0 = arith.constant 0 : i32
    %c0_i32_1 = arith.constant 0 : i32
    return %c0_i32, %c0_i32_0 : i32, i32
  }
  func.func @transform_6(%arg0: i32) -> (i32, i32) {
    %c0_i32 = arith.constant 0 : i32
    %c0_i32_0 = arith.constant 0 : i32
    %c0_i32_1 = arith.constant 0 : i32
    return %c0_i32, %c0_i32_0 : i32, i32
  }
  func.func @transform_7(%arg0: i32) -> (i32, i32, i32) {
    %c0_i32 = arith.constant 0 : i32
    %c0_i32_0 = arith.constant 0 : i32
    %c0_i32_1 = arith.constant 0 : i32
    return %arg0, %c0_i32, %c0_i32_0 : i32, i32, i32
  }
}

module attributes {stable_mosaic.version = 11 : i64} {
  func.func @head_kernel(%arg0: memref<2x128xf32, #tpu.memory_space<vmem>>, %arg1: memref<1x128xf32, #tpu.memory_space<vmem>>, %arg2: memref<1x128xf32, #tpu.memory_space<vmem>>, %arg3: memref<128x128xbf16, #tpu.memory_space<vmem>>, %arg4: memref<1x128xf32, #tpu.memory_space<vmem>>, %arg5: memref<2x128xf32, #tpu.memory_space<vmem>>) attributes {dimension_semantics = [], scalar_prefetch = 0 : i64, scratch_operands = 0 : i64, tpu.core_type = #tpu.core_type<tc>} {
    %c0 = arith.constant 0 : index
    %c0_0 = arith.constant 0 : index
    %0 = vector.load %arg0[%c0, %c0_0] : memref<2x128xf32, #tpu.memory_space<vmem>>, vector<2x128xf32>
    %cst = arith.constant dense<0.000000e+00> : vector<2xf32>
    %1 = vector.multi_reduction <add>, %0, %cst [1] : vector<2x128xf32> to vector<2xf32>
    %2 = vector.shape_cast %1 : vector<2xf32> to vector<2x1xf32>
    %cst_1 = arith.constant 1.280000e+02 : f32
    %3 = vector.broadcast %cst_1 : f32 to vector<2x1xf32>
    %4 = arith.divf %2, %3 : vector<2x1xf32>
    %5 = vector.broadcast %4 : vector<2x1xf32> to vector<2x128xf32>
    %6 = arith.subf %0, %5 : vector<2x128xf32>
    %7 = arith.mulf %6, %6 : vector<2x128xf32>
    %cst_2 = arith.constant dense<0.000000e+00> : vector<2xf32>
    %8 = vector.multi_reduction <add>, %7, %cst_2 [1] : vector<2x128xf32> to vector<2xf32>
    %9 = vector.shape_cast %8 : vector<2xf32> to vector<2x1xf32>
    %cst_3 = arith.constant 1.280000e+02 : f32
    %10 = vector.broadcast %cst_3 : f32 to vector<2x1xf32>
    %11 = arith.divf %9, %10 : vector<2x1xf32>
    %12 = vector.broadcast %4 : vector<2x1xf32> to vector<2x128xf32>
    %13 = arith.subf %0, %12 : vector<2x128xf32>
    %cst_4 = arith.constant 9.99999997E-7 : f32
    %14 = vector.broadcast %cst_4 : f32 to vector<2x1xf32>
    %15 = arith.addf %11, %14 : vector<2x1xf32>
    %16 = math.rsqrt %15 : vector<2x1xf32>
    %17 = vector.broadcast %16 : vector<2x1xf32> to vector<2x128xf32>
    %18 = arith.mulf %13, %17 : vector<2x128xf32>
    %c0_5 = arith.constant 0 : index
    %c0_6 = arith.constant 0 : index
    %19 = vector.load %arg1[%c0_5, %c0_6] : memref<1x128xf32, #tpu.memory_space<vmem>>, vector<1x128xf32>
    %20 = vector.broadcast %19 : vector<1x128xf32> to vector<2x128xf32>
    %21 = arith.mulf %18, %20 : vector<2x128xf32>
    %c0_7 = arith.constant 0 : index
    %c0_8 = arith.constant 0 : index
    %22 = vector.load %arg2[%c0_7, %c0_8] : memref<1x128xf32, #tpu.memory_space<vmem>>, vector<1x128xf32>
    %23 = vector.broadcast %22 : vector<1x128xf32> to vector<2x128xf32>
    %24 = arith.addf %21, %23 : vector<2x128xf32>
    %25 = arith.truncf %24 : vector<2x128xf32> to vector<2x128xbf16>
    %c0_9 = arith.constant 0 : index
    %c0_10 = arith.constant 0 : index
    %26 = vector.load %arg3[%c0_9, %c0_10] : memref<128x128xbf16, #tpu.memory_space<vmem>>, vector<128x128xbf16>
    %cst_11 = arith.constant dense<0.000000e+00> : vector<2x128xf32>
    %27 = tpu.matmul %25, %26, %cst_11 {dimension_numbers = #tpu.dot_dimension_numbers<[1], [0], [0], [1], [0, 0, 1, 1], [], []>} : vector<2x128xbf16>, vector<128x128xbf16>, vector<2x128xf32> -> vector<2x128xf32>
    %c0_12 = arith.constant 0 : index
    %c0_13 = arith.constant 0 : index
    %28 = vector.load %arg4[%c0_12, %c0_13] : memref<1x128xf32, #tpu.memory_space<vmem>>, vector<1x128xf32>
    %29 = vector.broadcast %28 : vector<1x128xf32> to vector<2x128xf32>
    %30 = arith.addf %27, %29 : vector<2x128xf32>
    %31 = arith.mulf %30, %30 : vector<2x128xf32>
    %cst_14 = arith.constant dense<0.000000e+00> : vector<2xf32>
    %32 = vector.multi_reduction <add>, %31, %cst_14 [1] : vector<2x128xf32> to vector<2xf32>
    %33 = vector.shape_cast %32 : vector<2xf32> to vector<2x1xf32>
    %34 = math.sqrt %33 : vector<2x1xf32>
    %cst_15 = arith.constant 9.99999996E-13 : f32
    %35 = vector.broadcast %cst_15 : f32 to vector<2x1xf32>
    %36 = arith.maximumf %34, %35 : vector<2x1xf32>
    %37 = vector.broadcast %36 : vector<2x1xf32> to vector<2x128xf32>
    %38 = arith.divf %30, %37 : vector<2x128xf32>
    %c0_16 = arith.constant 0 : index
    %c0_17 = arith.constant 0 : index
    %39 = vector.load %arg5[%c0_16, %c0_17] : memref<2x128xf32, #tpu.memory_space<vmem>>, vector<2x128xf32>
    tpu.vector_store %arg5[%c0_16, %c0_17], %38 {strides = array<i32>} : memref<2x128xf32, #tpu.memory_space<vmem>>, vector<2x128xf32>,
    return
  }
}

</mosaic_0001>

<llo_original>
// kernel: _lambda_.11
$region0: #{_lambda_.11}
  #allocation0 [shape = 'u32[]', space=smem, size = 0x4, offset = 0x4, fixed_abs, tag = 'smem constant byte address 0x4 - core index']
  #allocation1 [shape = 'u32[144,128]{1,0:T(1,128)}', space=vmem, size = 0x12000, scoped, tag = 'internal scratch']
  %s0 = inlined_call_operand.vmem [shape: f32[2,128], index: 0, kind: input, shape index: {}]
  %s1 = inlined_call_operand.vmem [shape: f32[1,128], index: 1, kind: input, shape index: {}]
  %s2 = inlined_call_operand.vmem [shape: f32[1,128], index: 2, kind: input, shape index: {}]
  %s3 = inlined_call_operand.vmem [shape: bf16[128,128], index: 3, kind: input, shape index: {}]
  %s4 = inlined_call_operand.vmem [shape: f32[1,128], index: 4, kind: input, shape index: {}]
  %s5 = inlined_call_operand.hbm [shape: f32[2,128], index: 5, kind: output, shape index: {}]
  %s6 = sld [smem:[#allocation0]]
  $region30: #{_lambda_.11} parent=0
    _
  %s8 = ssub.s32 1, %s6
  %s9 = scalar_select 0, %s8, %s6
  $region1: #{_lambda_.11} parent=0
    #allocation2 [shape = 'u8[1024]{0}', space=vmem, size = 0x400, scoped, tag = 'output window, operand 0, single buffered']
    #allocation3 [shape = 's32[1]{0}', space=sflag, size = 0x4, scoped, tag = 'scoped memory for _lambda_.11']
    %10 = vsyncpa [#allocation3], 0
    // Predicated region
    $region2: #{_lambda_.11} parent=1 // pred_check
      _
    $region3: #{_lambda_.11} parent=1 // pred_check_branch
      %12 = sbr.rel (0) target = $region5
    $region4: #{_lambda_.11} parent=1 // pred_region
      _
    $region5: #{_lambda_.11} parent=1 // pred_fallthru
      _
    // Predicated region
    $region6: #{_lambda_.11} parent=1 // pred_check
      _
    $region7: #{_lambda_.11} parent=1 // pred_check_branch
      %14 = sbr.rel (0) target = $region9
    $region8: #{_lambda_.11} parent=1 // pred_region
      _
    $region9: #{_lambda_.11} parent=1 // pred_fallthru
      _
    // Predicated region
    $region10: #{_lambda_.11} parent=1 // pred_check
      _
    $region11: #{_lambda_.11} parent=1 // pred_check_branch
      %16 = sbr.rel (0) target = $region13
    $region12: #{_lambda_.11} parent=1 // pred_region
      _
    $region13: #{_lambda_.11} parent=1 // pred_fallthru
      _
    // Predicated region
    $region14: #{_lambda_.11} parent=1 // pred_check
      _
    $region15: #{_lambda_.11} parent=1 // pred_check_branch
      %18 = sbr.rel (0) target = $region17
    $region16: #{_lambda_.11} parent=1 // pred_region
      _
    $region17: #{_lambda_.11} parent=1 // pred_fallthru
      _
    // Predicated region
    $region18: #{_lambda_.11} parent=1 // pred_check
      _
    $region19: #{_lambda_.11} parent=1 // pred_check_branch
      %20 = sbr.rel (0) target = $region21
    $region20: #{_lambda_.11} parent=1 // pred_region
      _
    $region21: #{_lambda_.11} parent=1 // pred_fallthru
      _
    %v22 = vld [vmem:[%s0] sm:$0x3]
    %vm23 = vcmask 1041408
    %v24 = vsel %vm23, %v22, 0.0
    %25 = vadd.xlane.f32.xlu0 %v24
    %v26 = vpop.xlane.xlu0 %25
    %v27 = vrcp.pop 128.0
    %v28 = vmul.f32 %v26, %v27
    %v29 = vsub.f32 %v22, %v28
    %v30 = vmul.f32 %v29, %v29
    %v31 = vsel %vm23, %v30, 0.0
    %32 = vadd.xlane.f32.xlu0 %v31
    %v33 = vpop.xlane.xlu0 %32
    %v34 = vmul.f32 %v33, %v27
    %v35 = vadd.f32 %v34, 1e-06
    %v36 = vrsqrt.pop %v35
    %v37 = vmul.f32 %v29, %v36
    %v38 = vld [vmem:[%s1] sm:$0x1]
    %v40 = vlaneseq
    %v41 = vshrl.u32 %v40, 7
    %v42 = vsub.s32 0, %v41
    %v43 = vrot.slane %v38, %v42
    %v45 = vmul.f32 %v37, %v43
    %v46 = vld [vmem:[%s2] sm:$0x1]
    %v48 = vlaneseq
    %v49 = vshrl.u32 %v48, 7
    %v50 = vsub.s32 0, %v49
    %v51 = vrot.slane %v46, %v50
    %v53 = vadd.f32 %v45, %v51
    %v54 = vpack.c.bf16 %v53, %v53
    %v55 = vld [vmem:[%s3] sm:$0xf]
    %v56 = vld [vmem:[%s3 + $0x4] sm:$0xf]
    %v57 = vld [vmem:[%s3 + $0x8] sm:$0xf]
    %v58 = vld [vmem:[%s3 + $0xc] sm:$0xf]
    %v59 = vld [vmem:[%s3 + $0x10] sm:$0xf]
    %v60 = vld [vmem:[%s3 + $0x14] sm:$0xf]
    %v61 = vld [vmem:[%s3 + $0x18] sm:$0xf]
    %v62 = vld [vmem:[%s3 + $0x1c] sm:$0xf]
    %v63 = vld [vmem:[%s3 + $0x20] sm:$0xf]
    %v64 = vld [vmem:[%s3 + $0x24] sm:$0xf]
    %v65 = vld [vmem:[%s3 + $0x28] sm:$0xf]
    %v66 = vld [vmem:[%s3 + $0x2c] sm:$0xf]
    %v67 = vld [vmem:[%s3 + $0x30] sm:$0xf]
    %v68 = vld [vmem:[%s3 + $0x34] sm:$0xf]
    %v69 = vld [vmem:[%s3 + $0x38] sm:$0xf]
    %v70 = vld [vmem:[%s3 + $0x3c] sm:$0xf]
    %v71 = vld [vmem:[%s4] sm:$0x1]
    %v73 = vlaneseq
    %v74 = vshrl.u32 %v73, 7
    %v75 = vsub.s32 0, %v74
    %v76 = vrot.slane %v71, %v75
    %v94 = vunpack.c.l.b16 %v55
    %v95 = vunpack.c.l.b16 %v56
    %v96 = vunpack.c.l.b16 %v57
    %v97 = vunpack.c.l.b16 %v58
    %v98 = vunpack.c.l.b16 %v59
    %v99 = vunpack.c.l.b16 %v60
    %v100 = vunpack.c.l.b16 %v61
    %v101 = vunpack.c.l.b16 %v62
    %v102 = vunpack.c.l.b16 %v63
    %v103 = vunpack.c.l.b16 %v64
    %v104 = vunpack.c.l.b16 %v65
    %v105 = vunpack.c.l.b16 %v66
    %v106 = vunpack.c.l.b16 %v67
    %v107 = vunpack.c.l.b16 %v68
    %v108 = vunpack.c.l.b16 %v69
    %v109 = vunpack.c.l.b16 %v70
    %v110 = vpack.c.b16 %v95, %v94
    %v111 = vpack.c.b16 %v97, %v96
    %v112 = vpack.c.b16 %v99, %v98
    %v113 = vpack.c.b16 %v101, %v100
    %v114 = vpack.c.b16 %v103, %v102
    %v115 = vpack.c.b16 %v105, %v104
    %v116 = vpack.c.b16 %v107, %v106
    %v117 = vpack.c.b16 %v109, %v108
    %126 = vmatprep.subr.bf16.mxu0 0
    %127 = vmatpush1.bf16.msra.mxu0 %v110
    %128 = vmatprep.subr.bf16.mxu0 0
    %129 = vmatpush1.bf16.msra.mxu0 %v111
    %130 = vmatprep.subr.bf16.mxu0 0
    %131 = vmatpush1.bf16.msra.mxu0 %v112
    %132 = vmatprep.subr.bf16.mxu0 0
    %133 = vmatpush1.bf16.msra.mxu0 %v113
    %134 = vmatprep.subr.bf16.mxu0 0
    %135 = vmatpush1.bf16.msra.mxu0 %v114
    %136 = vmatprep.subr.bf16.mxu0 0
    %137 = vmatpush1.bf16.msra.mxu0 %v115
    %138 = vmatprep.subr.bf16.mxu0 0
    %139 = vmatpush1.bf16.msra.mxu0 %v116
    %140 = vmatprep.subr.bf16.mxu0 0
    %141 = vmatpush1.bf16.msra.mxu0 %v117
    %142 = vmatprep.subr.bf16.mxu0 0
    %143 = vmatpush1.bf16.msra.mxu0 0
    %144 = vmatprep.subr.bf16.mxu0 0
    %145 = vmatpush1.bf16.msra.mxu0 0
    %146 = vmatprep.subr.bf16.mxu0 0
    %147 = vmatpush1.bf16.msra.mxu0 0
    %148 = vmatprep.subr.bf16.mxu0 0
    %149 = vmatpush1.bf16.msra.mxu0 0
    %150 = vmatprep.subr.bf16.mxu0 0
    %151 = vmatpush1.bf16.msra.mxu0 0
    %152 = vmatprep.subr.bf16.mxu0 0
    %153 = vmatpush1.bf16.msra.mxu0 0
    %154 = vmatprep.subr.bf16.mxu0 0
    %155 = vmatpush1.bf16.msra.mxu0 0
    %156 = vmatprep.subr.bf16.mxu0 0
    %157 = vmatpush1.bf16.msra.mxu0 0
    %158 = vmatprep.mubr.bf16.mxu0 0
    %159 = vmatmul.mubr.bf16.gmra.mrb[0].mxu0 %v54
    %v160 = vpop.f32.mrb[0].mxu0
    %v161 = vadd.f32 %v76, %v160
    %v162 = vpop.f32.mrb[0].mxu0
    %v163 = vpop.f32.mrb[0].mxu0
    %v164 = vpop.f32.mrb[0].mxu0
    %165 = vdwg.mxu0
    %v166 = vmul.f32 %v161, %v161
    %v167 = vsel %vm23, %v166, 0.0
    %168 = vadd.xlane.f32.xlu0 %v167
    %v169 = vpop.xlane.xlu0 %168
    %v170 = vrsqrt.pop %v169
    %v171 = vmul.f32 %v169, %v170
    %vm172 = vcmp.eq.f32.partialorder %v169, inf
    %v173 = vsel %vm172, %v169, %v171
    %vm174 = vcmp.eq.f32.partialorder %v169, 0.0
    %v175 = vand.u32 %v169, 2147483648
    %v176 = vsel %vm174, %v175, %v173
    %v177 = vmax.f32 %v176, 1e-12
    %v178 = vrcp.pop %v177
    %v179 = vmul.f32 %v161, %v178
    %180 = vst [vmem:[#allocation2] sm:$0x3] %v179
    // Predicated region
    $region22: #{_lambda_.11} parent=1 // pred_check
      _
    $region23: #{_lambda_.11} parent=1 // pred_check_branch
      %182 = sbr.rel (0) target = $region25
    $region24: #{_lambda_.11} parent=1 // pred_region
      %s184 = ssub.s32 32, 32
      %185 = vsyncadd [#allocation3], %s184
      %s187 = sshll.u32 [#allocation2], 4
      %s188 = int_to_ptr.vmem [resolvable:$true] %s187
      %190 = dma.vmem_to_hbm [thread:$0]  %s188, 32, %s5, [#allocation3]
    $region25: #{_lambda_.11} parent=1 // pred_fallthru
      _
    // Predicated region
    $region26: #{_lambda_.11} parent=1 // pred_check
      _
    $region27: #{_lambda_.11} parent=1 // pred_check_branch
      %192 = sbr.rel (0) target = $region29
    $region28: #{_lambda_.11} parent=1 // pred_region
      %193 = dma.done [#allocation3], 32
    $region29: #{_lambda_.11} parent=1 // pred_fallthru
      _
    %194 = vsyncpa [#allocation3], 1

// kernel: _lambda_.6
$region0: #{_lambda_.6}
  #allocation0 [shape = 'u32[]', space=smem, size = 0x4, offset = 0x4, fixed_abs, tag = 'smem constant byte address 0x4 - core index']
  #allocation1 [shape = 'u32[144,128]{1,0:T(1,128)}', space=vmem, size = 0x12000, scoped, tag = 'internal scratch']
  %s0 = inlined_call_operand.vmem [shape: f32[2,4,192], index: 0, kind: input, shape index: {}]
  %s1 = inlined_call_operand.vmem [shape: bf16[192,128], index: 1, kind: input, shape index: {}]
  %s2 = inlined_call_operand.vmem [shape: f32[1,128], index: 2, kind: input, shape index: {}]
  %s3 = inlined_call_operand.vmem [shape: f32[1,1,128], index: 3, kind: input, shape index: {}]
  %s4 = inlined_call_operand.vmem [shape: f32[1,5,128], index: 4, kind: input, shape index: {}]
  %s5 = inlined_call_operand.vmem [shape: f32[2,5,128], index: 5, kind: output, shape index: {}]
  %s6 = sld [smem:[#allocation0]]
  $region53: #{_lambda_.6} parent=0
    _
  %s8 = ssub.s32 1, %s6
  %s9 = scalar_select 0, %s8, %s6
  loop: start=0, step=1, limit=4
  $region2: #{_lambda_.6} parent=0 // loop_pre_header
    _
  $region3: #{_lambda_.6} parent=0 // loop_header
    %s11 = sphi 0, %s15
    %p12 = scmp.ge.s32.totalorder %s11, 4
    %s21 = sphi 0, %s23
    %s24 = sphi 0, %s21
    %s25 = sphi 0, %s24
    %s41 = sphi 0, %s25
    %s45 = sphi 0, %s45
    %s47 = sphi 0, %s45
    %s48 = sphi 0, %s47
    %s62 = sphi 0, %s48
    %s66 = sphi 0, %s66
    %s68 = sphi 0, %s66
    %s69 = sphi 0, %s68
    %s83 = sphi 0, %s69
    %s87 = sphi 0, %s87
    %s89 = sphi 0, %s87
    %s90 = sphi 0, %s89
    %s104 = sphi 0, %s90
    %s108 = sphi 0, %s108
    %s110 = sphi 0, %s108
    %s111 = sphi 0, %s110
    %s125 = sphi 0, %s111
    %s131 = sphi 0, %s133
    %s134 = sphi 0, %s131
    %s135 = sphi 0, %s134
    %s151 = sphi 0, %s135
  $region4: #{_lambda_.6} parent=0 // loop_header_branch
    %14 = sbr.rel (%p12) target = $region8
  $region5: #{_lambda_.6} parent=0 // loop_body
    %s16 = ssub.s32 %s11, 1
    %s17 = ssub.s32 %s11, 2
    %s18 = sadd.s32 %s11, 1
    %s19 = ssub.s32 %s11, %s18
    %p20 = scmp.eq.s32.totalorder %s19, 0
    %s22 = sadd.s32 %s21, 1
    %s23 = scalar_select %p20, %s21, %s22
    %p26 = pneg %p20
    %p27 = scmp.eq.s32.totalorder %s11, 1
    %p28 = por %p26, %p27
    %p29 = scmp.ne.s32.totalorder %s21, %s24
    %p30 = scmp.eq.s32.totalorder %s11, 0
    %p31 = por %p29, %p30
    %p32 = scmp.ne.s32.totalorder %s21, %s24
    %p33 = scmp.eq.s32.totalorder %s16, 1
    %p34 = por %p32, %p33
    %p35 = scmp.ne.s32.totalorder %s24, %s25
    %p36 = scmp.eq.s32.totalorder %s16, 0
    %p37 = por %p35, %p36
    %p38 = scmp.ne.s32.totalorder %s24, %s25
    %p39 = scmp.eq.s32.totalorder %s17, 1
    %p40 = por %p38, %p39
    %p42 = scmp.ne.s32.totalorder %s25, %s41
    %p43 = scmp.eq.s32.totalorder %s17, 0
    %p44 = por %p42, %p43
    %s46 = sadd.s32 %s45, 1
    %p49 = scmp.eq.s32.totalorder %s11, 1
    %p50 = scmp.ne.s32.totalorder %s45, %s47
    %p51 = scmp.eq.s32.totalorder %s11, 0
    %p52 = por %p50, %p51
    %p53 = scmp.ne.s32.totalorder %s45, %s47
    %p54 = scmp.eq.s32.totalorder %s16, 1
    %p55 = por %p53, %p54
    %p56 = scmp.ne.s32.totalorder %s47, %s48
    %p57 = scmp.eq.s32.totalorder %s16, 0
    %p58 = por %p56, %p57
    %p59 = scmp.ne.s32.totalorder %s47, %s48
    %p60 = scmp.eq.s32.totalorder %s17, 1
    %p61 = por %p59, %p60
    %p63 = scmp.ne.s32.totalorder %s48, %s62
    %p64 = scmp.eq.s32.totalorder %s17, 0
    %p65 = por %p63, %p64
    %s67 = sadd.s32 %s66, 1
    %p70 = scmp.eq.s32.totalorder %s11, 1
    %p71 = scmp.ne.s32.totalorder %s66, %s68
    %p72 = scmp.eq.s32.totalorder %s11, 0
    %p73 = por %p71, %p72
    %p74 = scmp.ne.s32.totalorder %s66, %s68
    %p75 = scmp.eq.s32.totalorder %s16, 1
    %p76 = por %p74, %p75
    %p77 = scmp.ne.s32.totalorder %s68, %s69
    %p78 = scmp.eq.s32.totalorder %s16, 0
    %p79 = por %p77, %p78
    %p80 = scmp.ne.s32.totalorder %s68, %s69
    %p81 = scmp.eq.s32.totalorder %s17, 1
    %p82 = por %p80, %p81
    %p84 = scmp.ne.s32.totalorder %s69, %s83
    %p85 = scmp.eq.s32.totalorder %s17, 0
    %p86 = por %p84, %p85
    %s88 = sadd.s32 %s87, 1
    %p91 = scmp.eq.s32.totalorder %s11, 1
    %p92 = scmp.ne.s32.totalorder %s87, %s89
    %p93 = scmp.eq.s32.totalorder %s11, 0
    %p94 = por %p92, %p93
    %p95 = scmp.ne.s32.totalorder %s87, %s89
    %p96 = scmp.eq.s32.totalorder %s16, 1
    %p97 = por %p95, %p96
    %p98 = scmp.ne.s32.totalorder %s89, %s90
    %p99 = scmp.eq.s32.totalorder %s16, 0
    %p100 = por %p98, %p99
    %p101 = scmp.ne.s32.totalorder %s89, %s90
    %p102 = scmp.eq.s32.totalorder %s17, 1
    %p103 = por %p101, %p102
    %p105 = scmp.ne.s32.totalorder %s90, %s104
    %p106 = scmp.eq.s32.totalorder %s17, 0
    %p107 = por %p105, %p106
    %s109 = sadd.s32 %s108, 1
    %p112 = scmp.eq.s32.totalorder %s11, 1
    %p113 = scmp.ne.s32.totalorder %s108, %s110
    %p114 = scmp.eq.s32.totalorder %s11, 0
    %p115 = por %p113, %p114
    %p116 = scmp.ne.s32.totalorder %s108, %s110
    %p117 = scmp.eq.s32.totalorder %s16, 1
    %p118 = por %p116, %p117
    %p119 = scmp.ne.s32.totalorder %s110, %s111
    %p120 = scmp.eq.s32.totalorder %s16, 0
    %p121 = por %p119, %p120
    %p122 = scmp.ne.s32.totalorder %s110, %s111
    %p123 = scmp.eq.s32.totalorder %s17, 1
    %p124 = por %p122, %p123
    %p126 = scmp.ne.s32.totalorder %s111, %s125
    %p127 = scmp.eq.s32.totalorder %s17, 0
    %p128 = por %p126, %p127
    %s129 = ssub.s32 %s11, %s18
    %p130 = scmp.eq.s32.totalorder %s129, 0
    %s132 = sadd.s32 %s131, 1
    %s133 = scalar_select %p130, %s131, %s132
    %p136 = pneg %p130
    %p137 = scmp.eq.s32.totalorder %s11, 1
    %p138 = por %p136, %p137
    %p139 = scmp.ne.s32.totalorder %s131, %s134
    %p140 = scmp.eq.s32.totalorder %s11, 0
    %p141 = por %p139, %p140
    %p142 = scmp.ne.s32.totalorder %s131, %s134
    %p143 = scmp.eq.s32.totalorder %s16, 1
    %p144 = por %p142, %p143
    %p145 = scmp.ne.s32.totalorder %s134, %s135
    %p146 = scmp.eq.s32.totalorder %s16, 0
    %p147 = por %p145, %p146
    %p148 = scmp.ne.s32.totalorder %s134, %s135
    %p149 = scmp.eq.s32.totalorder %s17, 1
    %p150 = por %p148, %p149
    %p152 = scmp.ne.s32.totalorder %s135, %s151
    %p153 = scmp.eq.s32.totalorder %s17, 0
    %p154 = por %p152, %p153
    %p155 = scmp.le.s32.totalorder 1, %s11
    %p156 = scmp.lt.s32.totalorder %s11, 3
    %p157 = pnand %p155, %p156
    %p158 = pneg %p157
    // Predicated region
    $region9: #{_lambda_.6} parent=5 // pred_check
      _
    $region10: #{_lambda_.6} parent=5 // pred_check_branch
      %160 = sbr.rel (%p157) target = $region12
    $region11: #{_lambda_.6} parent=5 // pred_region
      %s161 = ssub.s32 %s11, 1
      // Predicated region
      $region13: #{_lambda_.6} parent=11 // pred_check
        %p162 = pneg %p58
      $region14: #{_lambda_.6} parent=11 // pred_check_branch
        %164 = sbr.rel (%p162) target = $region16
      $region15: #{_lambda_.6} parent=11 // pred_region
        _
      $region16: #{_lambda_.6} parent=11 // pred_fallthru
        _
      // Predicated region
      $region17: #{_lambda_.6} parent=11 // pred_check
        %p165 = pneg %p79
      $region18: #{_lambda_.6} parent=11 // pred_check_branch
        %167 = sbr.rel (%p165) target = $region20
      $region19: #{_lambda_.6} parent=11 // pred_region
        _
      $region20: #{_lambda_.6} parent=11 // pred_fallthru
        _
      // Predicated region
      $region21: #{_lambda_.6} parent=11 // pred_check
        %p168 = pneg %p100
      $region22: #{_lambda_.6} parent=11 // pred_check_branch
        %170 = sbr.rel (%p168) target = $region24
      $region23: #{_lambda_.6} parent=11 // pred_region
        _
      $region24: #{_lambda_.6} parent=11 // pred_fallthru
        _
      // Predicated region
      $region25: #{_lambda_.6} parent=11 // pred_check
        %p171 = pneg %p121
      $region26: #{_lambda_.6} parent=11 // pred_check_branch
        %173 = sbr.rel (%p171) target = $region28
      $region27: #{_lambda_.6} parent=11 // pred_region
        _
      $region28: #{_lambda_.6} parent=11 // pred_fallthru
        _
    $region12: #{_lambda_.6} parent=5 // pred_fallthru
      _
    %p174 = scmp.lt.s32.totalorder %s11, 2
    // Predicated region
    $region29: #{_lambda_.6} parent=5 // pred_check
      %p175 = pneg %p174
    $region30: #{_lambda_.6} parent=5 // pred_check_branch
      %177 = sbr.rel (%p175) target = $region32
    $region31: #{_lambda_.6} parent=5 // pred_region
      // Predicated region
      $region33: #{_lambda_.6} parent=31 // pred_check
        %p178 = pneg %p31
      $region34: #{_lambda_.6} parent=31 // pred_check_branch
        %180 = sbr.rel (%p178) target = $region36
      $region35: #{_lambda_.6} parent=31 // pred_region
        %p181 = scmp.lt.s32.totalorder %s11, 1
        %s182 = scalar_select %p181, %s11, 1
        %s183 = smul.addr %s182, 2
        %s184 = smul.addr %s183, 4
        %s185 = scalar_lea.vmem %s0, %s184
      $region36: #{_lambda_.6} parent=31 // pred_fallthru
        _
    $region32: #{_lambda_.6} parent=5 // pred_fallthru
      _
    %p186 = scmp.le.s32.totalorder 1, %s11
    %p187 = scmp.lt.s32.totalorder %s11, 3
    %p188 = pnand %p186, %p187
    %p189 = pneg %p188
    // Predicated region
    $region37: #{_lambda_.6} parent=5 // pred_check
      _
    $region38: #{_lambda_.6} parent=5 // pred_check_branch
      %191 = sbr.rel (%p188) target = $region40
    $region39: #{_lambda_.6} parent=5 // pred_region
      %s192 = ssub.s32 %s11, 1
      %p193 = scmp.lt.s32.totalorder %s16, 1
      %s194 = scalar_select %p193, %s16, 1
      %s195 = smul.addr %s194, 2
      %s196 = smul.addr %s195, 4
      %s197 = scalar_lea.vmem %s0, %s196
      %p198 = pneg %p37
      %p199 = pneg %p34
      %p200 = pneg %p58
      %p201 = pneg %p55
      %p202 = pneg %p79
      %p203 = pneg %p76
      %p204 = pneg %p100
      %p205 = pneg %p97
      %p206 = pneg %p121
      %p207 = pneg %p118
      %p208 = pneg %p147
      %p209 = pneg %p144
      %p210 = scmp.lt.s32.totalorder %s16, 1
      %s211 = scalar_select %p210, %s16, 1
      %s212 = smul.addr %s211, 8
      %s213 = scalar_lea.vmem %s5, %s212
      %p214 = scmp.lt.s32.totalorder %s16, 1
      %s215 = scalar_select %p214, %s16, 1
      %s216 = smul.addr %s215, 2
      %s217 = smul.addr %s216, 4
      %s218 = scalar_lea.vmem %s0, %s217
      %p219 = scmp.lt.s32.totalorder %s16, 1
      %s220 = scalar_select %p219, %s16, 1
      %s221 = smul.addr %s220, 8
      %s222 = scalar_lea.vmem %s5, %s221
      %v224 = vld [vmem:[%s218] sm:$0xff]
      %v226 = vcombine.high %v224, %v224
      %v228 = vpack.c.bf16 %v224, %v224
      %v229 = vpack.c.bf16 %v226, %v226
      %v230 = vld [vmem:[%s1] sm:$0xf]
      %v231 = vld [vmem:[%s1 + $0x4] sm:$0xf]
      %v232 = vld [vmem:[%s1 + $0x8] sm:$0xf]
      %v233 = vld [vmem:[%s1 + $0xc] sm:$0xf]
      %v234 = vld [vmem:[%s1 + $0x10] sm:$0xf]
      %v235 = vld [vmem:[%s1 + $0x14] sm:$0xf]
      %v236 = vld [vmem:[%s1 + $0x18] sm:$0xf]
      %v237 = vld [vmem:[%s1 + $0x1c] sm:$0xf]
      %v238 = vld [vmem:[%s1 + $0x20] sm:$0xf]
      %v239 = vld [vmem:[%s1 + $0x24] sm:$0xf]
      %v240 = vld [vmem:[%s1 + $0x28] sm:$0xf]
      %v241 = vld [vmem:[%s1 + $0x2c] sm:$0xf]
      %v242 = vld [vmem:[%s1 + $0x30] sm:$0xf]
      %v243 = vld [vmem:[%s1 + $0x34] sm:$0xf]
      %v244 = vld [vmem:[%s1 + $0x38] sm:$0xf]
      %v245 = vld [vmem:[%s1 + $0x3c] sm:$0xf]
      %v246 = vld [vmem:[%s1 + $0x40] sm:$0xf]
      %v247 = vld [vmem:[%s1 + $0x44] sm:$0xf]
      %v248 = vld [vmem:[%s1 + $0x48] sm:$0xf]
      %v249 = vld [vmem:[%s1 + $0x4c] sm:$0xf]
      %v250 = vld [vmem:[%s1 + $0x50] sm:$0xf]
      %v251 = vld [vmem:[%s1 + $0x54] sm:$0xf]
      %v252 = vld [vmem:[%s1 + $0x58] sm:$0xf]
      %v253 = vld [vmem:[%s1 + $0x5c] sm:$0xf]
      %v254 = vld [vmem:[%s2] sm:$0x1]
      %v256 = vlaneseq
      %v257 = vshrl.u32 %v256, 7
      %v258 = vsub.s32 0, %v257
      %v259 = vrot.slane %v254, %v258
      %v285 = vunpack.c.l.b16 %v230
      %v286 = vunpack.c.l.b16 %v231
      %v287 = vunpack.c.l.b16 %v232
      %v288 = vunpack.c.l.b16 %v233
      %v289 = vunpack.c.l.b16 %v234
      %v290 = vunpack.c.l.b16 %v235
      %v291 = vunpack.c.l.b16 %v236
      %v292 = vunpack.c.l.b16 %v237
      %v293 = vunpack.c.l.b16 %v238
      %v294 = vunpack.c.l.b16 %v239
      %v295 = vunpack.c.l.b16 %v240
      %v296 = vunpack.c.l.b16 %v241
      %v297 = vunpack.c.l.b16 %v242
      %v298 = vunpack.c.l.b16 %v243
      %v299 = vunpack.c.l.b16 %v244
      %v300 = vunpack.c.l.b16 %v245
      %v301 = vunpack.c.l.b16 %v246
      %v302 = vunpack.c.l.b16 %v247
      %v303 = vunpack.c.l.b16 %v248
      %v304 = vunpack.c.l.b16 %v249
      %v305 = vunpack.c.l.b16 %v250
      %v306 = vunpack.c.l.b16 %v251
      %v307 = vunpack.c.l.b16 %v252
      %v308 = vunpack.c.l.b16 %v253
      %v309 = vpack.c.b16 %v286, %v285
      %v310 = vpack.c.b16 %v288, %v287
      %v311 = vpack.c.b16 %v290, %v289
      %v312 = vpack.c.b16 %v292, %v291
      %v313 = vpack.c.b16 %v294, %v293
      %v314 = vpack.c.b16 %v296, %v295
      %v315 = vpack.c.b16 %v298, %v297
      %v316 = vpack.c.b16 %v300, %v299
      %v317 = vpack.c.b16 %v302, %v301
      %v318 = vpack.c.b16 %v304, %v303
      %v319 = vpack.c.b16 %v306, %v305
      %v320 = vpack.c.b16 %v308, %v307
      %vm333 = vcmask 523264
      %v335 = vsel %vm333, %v229, 0
      %337 = vmatprep.subr.bf16.mxu0 0
      %338 = vmatpush1.bf16.msra.mxu0 %v309
      %339 = vmatprep.subr.bf16.mxu0 0
      %340 = vmatpush1.bf16.msra.mxu0 %v310
      %341 = vmatprep.subr.bf16.mxu0 0
      %342 = vmatpush1.bf16.msra.mxu0 %v311
      %343 = vmatprep.subr.bf16.mxu0 0
      %344 = vmatpush1.bf16.msra.mxu0 %v312
      %345 = vmatprep.subr.bf16.mxu0 0
      %346 = vmatpush1.bf16.msra.mxu0 %v313
      %347 = vmatprep.subr.bf16.mxu0 0
      %348 = vmatpush1.bf16.msra.mxu0 %v314
      %349 = vmatprep.subr.bf16.mxu0 0
      %350 = vmatpush1.bf16.msra.mxu0 %v315
      %351 = vmatprep.subr.bf16.mxu0 0
      %352 = vmatpush1.bf16.msra.mxu0 %v316
      %353 = vmatprep.subr.bf16.mxu0 0
      %354 = vmatpush1.bf16.msra.mxu0 %v317
      %355 = vmatprep.subr.bf16.mxu0 0
      %356 = vmatpush1.bf16.msra.mxu0 %v318
      %357 = vmatprep.subr.bf16.mxu0 0
      %358 = vmatpush1.bf16.msra.mxu0 %v319
      %359 = vmatprep.subr.bf16.mxu0 0
      %360 = vmatpush1.bf16.msra.mxu0 %v320
      %361 = vmatprep.subr.bf16.mxu0 0
      %362 = vmatpush1.bf16.msra.mxu0 0
      %363 = vmatprep.subr.bf16.mxu0 0
      %364 = vmatpush1.bf16.msra.mxu0 0
      %365 = vmatprep.subr.bf16.mxu0 0
      %366 = vmatpush1.bf16.msra.mxu0 0
      %367 = vmatprep.subr.bf16.mxu0 0
      %368 = vmatpush1.bf16.msra.mxu0 0
      %369 = vmatprep.mubr.bf16.mxu0 %v335
      %370 = vmatmul.mubr.bf16.gmra.mrb[0].mxu0 %v228
      %v371 = vpop.f32.mrb[0].mxu0
      %v372 = vadd.f32 %v259, %v371
      %v373 = vpop.f32.mrb[0].mxu0
      %v374 = vpop.f32.mrb[0].mxu0
      %v375 = vpop.f32.mrb[0].mxu0
      %376 = vdwg.mxu0
      %v377 = vld [vmem:[%s4] sm:$0x1f]
      %v378 = vld [vmem:[%s3] sm:$0x1]
      %v379 = vadd.f32 %v378, %v377
      %380 = vst [vmem:[%s222] sm:$0x1] %v379
      %v382 = vrot.slane %v377, 1
      %v384 = vadd.f32 %v372, %v382
      %385 = vst [vmem:[%s222 + $0x1] sm:$0xf] %v384
      %p386 = scmp.lt.s32.totalorder %s16, 1
      %s387 = scalar_select %p386, %s16, 1
      %s388 = smul.addr %s387, 8
      %s389 = scalar_lea.vmem %s5, %s388
      // Predicated region
      $region41: #{_lambda_.6} parent=39 // pred_check
        %p390 = pneg %p144
      $region42: #{_lambda_.6} parent=39 // pred_check_branch
        %392 = sbr.rel (%p390) target = $region44
      $region43: #{_lambda_.6} parent=39 // pred_region
        _
      $region44: #{_lambda_.6} parent=39 // pred_fallthru
        _
    $region40: #{_lambda_.6} parent=5 // pred_fallthru
      _
    %p393 = scmp.le.s32.totalorder 2, %s11
    // Predicated region
    $region45: #{_lambda_.6} parent=5 // pred_check
      %p394 = pneg %p393
    $region46: #{_lambda_.6} parent=5 // pred_check_branch
      %396 = sbr.rel (%p394) target = $region48
    $region47: #{_lambda_.6} parent=5 // pred_region
      %s397 = ssub.s32 %s11, 2
      // Predicated region
      $region49: #{_lambda_.6} parent=47 // pred_check
        %p398 = pneg %p150
      $region50: #{_lambda_.6} parent=47 // pred_check_branch
        %400 = sbr.rel (%p398) target = $region52
      $region51: #{_lambda_.6} parent=47 // pred_region
        %p401 = scmp.lt.s32.totalorder %s17, 1
        %s402 = scalar_select %p401, %s17, 1
        %s403 = smul.addr %s402, 8
        %s404 = scalar_lea.vmem %s5, %s403
      $region52: #{_lambda_.6} parent=47 // pred_fallthru
        _
    $region48: #{_lambda_.6} parent=5 // pred_fallthru
      _
  $region6: #{_lambda_.6} parent=0 // loop_footer
    %s15 = sadd.s32 1, %s11
  $region7: #{_lambda_.6} parent=0 // loop_footer_branch
    %10 = sbr.rel target = $region3
  $region8: #{_lambda_.6} parent=0 // loop_exit
    _

// kernel: _lambda_.7
$region0: #{_lambda_.7}
  #allocation0 [shape = 'u32[]', space=smem, size = 0x4, offset = 0x4, fixed_abs, tag = 'smem constant byte address 0x4 - core index']
  #allocation1 [shape = 'u32[144,128]{1,0:T(1,128)}', space=vmem, size = 0x12000, scoped, tag = 'internal scratch']
  %s0 = inlined_call_operand.vmem [shape: f32[2,5,128], index: 0, kind: input, shape index: {}]
  %s1 = inlined_call_operand.vmem [shape: f32[1,128], index: 1, kind: input, shape index: {}]
  %s2 = inlined_call_operand.vmem [shape: f32[1,128], index: 2, kind: input, shape index: {}]
  %s3 = inlined_call_operand.vmem [shape: bf16[128,384], index: 3, kind: input, shape index: {}]
  %s4 = inlined_call_operand.vmem [shape: f32[1,384], index: 4, kind: input, shape index: {}]
  %s5 = inlined_call_operand.vmem [shape: bf16[128,128], index: 5, kind: input, shape index: {}]
  %s6 = inlined_call_operand.vmem [shape: f32[1,128], index: 6, kind: input, shape index: {}]
  %s7 = inlined_call_operand.vmem [shape: f32[2,5,128], index: 7, kind: output, shape index: {}]
  %s8 = sld [smem:[#allocation0]]
  $region61: #{_lambda_.7} parent=0
    _
  %s10 = ssub.s32 1, %s8
  %s11 = scalar_select 0, %s10, %s8
  loop: start=0, step=1, limit=4
  $region2: #{_lambda_.7} parent=0 // loop_pre_header
    _
  $region3: #{_lambda_.7} parent=0 // loop_header
    %s13 = sphi 0, %s17
    %p14 = scmp.ge.s32.totalorder %s13, 4
    %s23 = sphi 0, %s25
    %s26 = sphi 0, %s23
    %s27 = sphi 0, %s26
    %s43 = sphi 0, %s27
    %s47 = sphi 0, %s47
    %s49 = sphi 0, %s47
    %s50 = sphi 0, %s49
    %s64 = sphi 0, %s50
    %s68 = sphi 0, %s68
    %s70 = sphi 0, %s68
    %s71 = sphi 0, %s70
    %s85 = sphi 0, %s71
    %s89 = sphi 0, %s89
    %s91 = sphi 0, %s89
    %s92 = sphi 0, %s91
    %s106 = sphi 0, %s92
    %s110 = sphi 0, %s110
    %s112 = sphi 0, %s110
    %s113 = sphi 0, %s112
    %s127 = sphi 0, %s113
    %s131 = sphi 0, %s131
    %s133 = sphi 0, %s131
    %s134 = sphi 0, %s133
    %s148 = sphi 0, %s134
    %s152 = sphi 0, %s152
    %s154 = sphi 0, %s152
    %s155 = sphi 0, %s154
    %s169 = sphi 0, %s155
    %s175 = sphi 0, %s177
    %s178 = sphi 0, %s175
    %s179 = sphi 0, %s178
    %s195 = sphi 0, %s179
  $region4: #{_lambda_.7} parent=0 // loop_header_branch
    %16 = sbr.rel (%p14) target = $region8
  $region5: #{_lambda_.7} parent=0 // loop_body
    %s18 = ssub.s32 %s13, 1
    %s19 = ssub.s32 %s13, 2
    %s20 = sadd.s32 %s13, 1
    %s21 = ssub.s32 %s13, %s20
    %p22 = scmp.eq.s32.totalorder %s21, 0
    %s24 = sadd.s32 %s23, 1
    %s25 = scalar_select %p22, %s23, %s24
    %p28 = pneg %p22
    %p29 = scmp.eq.s32.totalorder %s13, 1
    %p30 = por %p28, %p29
    %p31 = scmp.ne.s32.totalorder %s23, %s26
    %p32 = scmp.eq.s32.totalorder %s13, 0
    %p33 = por %p31, %p32
    %p34 = scmp.ne.s32.totalorder %s23, %s26
    %p35 = scmp.eq.s32.totalorder %s18, 1
    %p36 = por %p34, %p35
    %p37 = scmp.ne.s32.totalorder %s26, %s27
    %p38 = scmp.eq.s32.totalorder %s18, 0
    %p39 = por %p37, %p38
    %p40 = scmp.ne.s32.totalorder %s26, %s27
    %p41 = scmp.eq.s32.totalorder %s19, 1
    %p42 = por %p40, %p41
    %p44 = scmp.ne.s32.totalorder %s27, %s43
    %p45 = scmp.eq.s32.totalorder %s19, 0
    %p46 = por %p44, %p45
    %s48 = sadd.s32 %s47, 1
    %p51 = scmp.eq.s32.totalorder %s13, 1
    %p52 = scmp.ne.s32.totalorder %s47, %s49
    %p53 = scmp.eq.s32.totalorder %s13, 0
    %p54 = por %p52, %p53
    %p55 = scmp.ne.s32.totalorder %s47, %s49
    %p56 = scmp.eq.s32.totalorder %s18, 1
    %p57 = por %p55, %p56
    %p58 = scmp.ne.s32.totalorder %s49, %s50
    %p59 = scmp.eq.s32.totalorder %s18, 0
    %p60 = por %p58, %p59
    %p61 = scmp.ne.s32.totalorder %s49, %s50
    %p62 = scmp.eq.s32.totalorder %s19, 1
    %p63 = por %p61, %p62
    %p65 = scmp.ne.s32.totalorder %s50, %s64
    %p66 = scmp.eq.s32.totalorder %s19, 0
    %p67 = por %p65, %p66
    %s69 = sadd.s32 %s68, 1
    %p72 = scmp.eq.s32.totalorder %s13, 1
    %p73 = scmp.ne.s32.totalorder %s68, %s70
    %p74 = scmp.eq.s32.totalorder %s13, 0
    %p75 = por %p73, %p74
    %p76 = scmp.ne.s32.totalorder %s68, %s70
    %p77 = scmp.eq.s32.totalorder %s18, 1
    %p78 = por %p76, %p77
    %p79 = scmp.ne.s32.totalorder %s70, %s71
    %p80 = scmp.eq.s32.totalorder %s18, 0
    %p81 = por %p79, %p80
    %p82 = scmp.ne.s32.totalorder %s70, %s71
    %p83 = scmp.eq.s32.totalorder %s19, 1
    %p84 = por %p82, %p83
    %p86 = scmp.ne.s32.totalorder %s71, %s85
    %p87 = scmp.eq.s32.totalorder %s19, 0
    %p88 = por %p86, %p87
    %s90 = sadd.s32 %s89, 1
    %p93 = scmp.eq.s32.totalorder %s13, 1
    %p94 = scmp.ne.s32.totalorder %s89, %s91
    %p95 = scmp.eq.s32.totalorder %s13, 0
    %p96 = por %p94, %p95
    %p97 = scmp.ne.s32.totalorder %s89, %s91
    %p98 = scmp.eq.s32.totalorder %s18, 1
    %p99 = por %p97, %p98
    %p100 = scmp.ne.s32.totalorder %s91, %s92
    %p101 = scmp.eq.s32.totalorder %s18, 0
    %p102 = por %p100, %p101
    %p103 = scmp.ne.s32.totalorder %s91, %s92
    %p104 = scmp.eq.s32.totalorder %s19, 1
    %p105 = por %p103, %p104
    %p107 = scmp.ne.s32.totalorder %s92, %s106
    %p108 = scmp.eq.s32.totalorder %s19, 0
    %p109 = por %p107, %p108
    %s111 = sadd.s32 %s110, 1
    %p114 = scmp.eq.s32.totalorder %s13, 1
    %p115 = scmp.ne.s32.totalorder %s110, %s112
    %p116 = scmp.eq.s32.totalorder %s13, 0
    %p117 = por %p115, %p116
    %p118 = scmp.ne.s32.totalorder %s110, %s112
    %p119 = scmp.eq.s32.totalorder %s18, 1
    %p120 = por %p118, %p119
    %p121 = scmp.ne.s32.totalorder %s112, %s113
    %p122 = scmp.eq.s32.totalorder %s18, 0
    %p123 = por %p121, %p122
    %p124 = scmp.ne.s32.totalorder %s112, %s113
    %p125 = scmp.eq.s32.totalorder %s19, 1
    %p126 = por %p124, %p125
    %p128 = scmp.ne.s32.totalorder %s113, %s127
    %p129 = scmp.eq.s32.totalorder %s19, 0
    %p130 = por %p128, %p129
    %s132 = sadd.s32 %s131, 1
    %p135 = scmp.eq.s32.totalorder %s13, 1
    %p136 = scmp.ne.s32.totalorder %s131, %s133
    %p137 = scmp.eq.s32.totalorder %s13, 0
    %p138 = por %p136, %p137
    %p139 = scmp.ne.s32.totalorder %s131, %s133
    %p140 = scmp.eq.s32.totalorder %s18, 1
    %p141 = por %p139, %p140
    %p142 = scmp.ne.s32.totalorder %s133, %s134
    %p143 = scmp.eq.s32.totalorder %s18, 0
    %p144 = por %p142, %p143
    %p145 = scmp.ne.s32.totalorder %s133, %s134
    %p146 = scmp.eq.s32.totalorder %s19, 1
    %p147 = por %p145, %p146
    %p149 = scmp.ne.s32.totalorder %s134, %s148
    %p150 = scmp.eq.s32.totalorder %s19, 0
    %p151 = por %p149, %p150
    %s153 = sadd.s32 %s152, 1
    %p156 = scmp.eq.s32.totalorder %s13, 1
    %p157 = scmp.ne.s32.totalorder %s152, %s154
    %p158 = scmp.eq.s32.totalorder %s13, 0
    %p159 = por %p157, %p158
    %p160 = scmp.ne.s32.totalorder %s152, %s154
    %p161 = scmp.eq.s32.totalorder %s18, 1
    %p162 = por %p160, %p161
    %p163 = scmp.ne.s32.totalorder %s154, %s155
    %p164 = scmp.eq.s32.totalorder %s18, 0
    %p165 = por %p163, %p164
    %p166 = scmp.ne.s32.totalorder %s154, %s155
    %p167 = scmp.eq.s32.totalorder %s19, 1
    %p168 = por %p166, %p167
    %p170 = scmp.ne.s32.totalorder %s155, %s169
    %p171 = scmp.eq.s32.totalorder %s19, 0
    %p172 = por %p170, %p171
    %s173 = ssub.s32 %s13, %s20
    %p174 = scmp.eq.s32.totalorder %s173, 0
    %s176 = sadd.s32 %s175, 1
    %s177 = scalar_select %p174, %s175, %s176
    %p180 = pneg %p174
    %p181 = scmp.eq.s32.totalorder %s13, 1
    %p182 = por %p180, %p181
    %p183 = scmp.ne.s32.totalorder %s175, %s178
    %p184 = scmp.eq.s32.totalorder %s13, 0
    %p185 = por %p183, %p184
    %p186 = scmp.ne.s32.totalorder %s175, %s178
    %p187 = scmp.eq.s32.totalorder %s18, 1
    %p188 = por %p186, %p187
    %p189 = scmp.ne.s32.totalorder %s178, %s179
    %p190 = scmp.eq.s32.totalorder %s18, 0
    %p191 = por %p189, %p190
    %p192 = scmp.ne.s32.totalorder %s178, %s179
    %p193 = scmp.eq.s32.totalorder %s19, 1
    %p194 = por %p192, %p193
    %p196 = scmp.ne.s32.totalorder %s179, %s195
    %p197 = scmp.eq.s32.totalorder %s19, 0
    %p198 = por %p196, %p197
    %p199 = scmp.le.s32.totalorder 1, %s13
    %p200 = scmp.lt.s32.totalorder %s13, 3
    %p201 = pnand %p199, %p200
    %p202 = pneg %p201
    // Predicated region
    $region9: #{_lambda_.7} parent=5 // pred_check
      _
    $region10: #{_lambda_.7} parent=5 // pred_check_branch
      %204 = sbr.rel (%p201) target = $region12
    $region11: #{_lambda_.7} parent=5 // pred_region
      %s205 = ssub.s32 %s13, 1
      // Predicated region
      $region13: #{_lambda_.7} parent=11 // pred_check
        %p206 = pneg %p60
      $region14: #{_lambda_.7} parent=11 // pred_check_branch
        %208 = sbr.rel (%p206) target = $region16
      $region15: #{_lambda_.7} parent=11 // pred_region
        _
      $region16: #{_lambda_.7} parent=11 // pred_fallthru
        _
      // Predicated region
      $region17: #{_lambda_.7} parent=11 // pred_check
        %p209 = pneg %p81
      $region18: #{_lambda_.7} parent=11 // pred_check_branch
        %211 = sbr.rel (%p209) target = $region20
      $region19: #{_lambda_.7} parent=11 // pred_region
        _
      $region20: #{_lambda_.7} parent=11 // pred_fallthru
        _
      // Predicated region
      $region21: #{_lambda_.7} parent=11 // pred_check
        %p212 = pneg %p102
      $region22: #{_lambda_.7} parent=11 // pred_check_branch
        %214 = sbr.rel (%p212) target = $region24
      $region23: #{_lambda_.7} parent=11 // pred_region
        _
      $region24: #{_lambda_.7} parent=11 // pred_fallthru
        _
      // Predicated region
      $region25: #{_lambda_.7} parent=11 // pred_check
        %p215 = pneg %p123
      $region26: #{_lambda_.7} parent=11 // pred_check_branch
        %217 = sbr.rel (%p215) target = $region28
      $region27: #{_lambda_.7} parent=11 // pred_region
        _
      $region28: #{_lambda_.7} parent=11 // pred_fallthru
        _
      // Predicated region
      $region29: #{_lambda_.7} parent=11 // pred_check
        %p218 = pneg %p144
      $region30: #{_lambda_.7} parent=11 // pred_check_branch
        %220 = sbr.rel (%p218) target = $region32
      $region31: #{_lambda_.7} parent=11 // pred_region
        _
      $region32: #{_lambda_.7} parent=11 // pred_fallthru
        _
      // Predicated region
      $region33: #{_lambda_.7} parent=11 // pred_check
        %p221 = pneg %p165
      $region34: #{_lambda_.7} parent=11 // pred_check_branch
        %223 = sbr.rel (%p221) target = $region36
      $region35: #{_lambda_.7} parent=11 // pred_region
        _
      $region36: #{_lambda_.7} parent=11 // pred_fallthru
        _
    $region12: #{_lambda_.7} parent=5 // pred_fallthru
      _
    %p224 = scmp.lt.s32.totalorder %s13, 2
    // Predicated region
    $region37: #{_lambda_.7} parent=5 // pred_check
      %p225 = pneg %p224
    $region38: #{_lambda_.7} parent=5 // pred_check_branch
      %227 = sbr.rel (%p225) target = $region40
    $region39: #{_lambda_.7} parent=5 // pred_region
      // Predicated region
      $region41: #{_lambda_.7} parent=39 // pred_check
        %p228 = pneg %p33
      $region42: #{_lambda_.7} parent=39 // pred_check_branch
        %230 = sbr.rel (%p228) target = $region44
      $region43: #{_lambda_.7} parent=39 // pred_region
        %p231 = scmp.lt.s32.totalorder %s13, 1
        %s232 = scalar_select %p231, %s13, 1
        %s233 = smul.addr %s232, 8
        %s234 = scalar_lea.vmem %s0, %s233
      $region44: #{_lambda_.7} parent=39 // pred_fallthru
        _
    $region40: #{_lambda_.7} parent=5 // pred_fallthru
      _
    %p235 = scmp.le.s32.totalorder 1, %s13
    %p236 = scmp.lt.s32.totalorder %s13, 3
    %p237 = pnand %p235, %p236
    %p238 = pneg %p237
    // Predicated region
    $region45: #{_lambda_.7} parent=5 // pred_check
      _
    $region46: #{_lambda_.7} parent=5 // pred_check_branch
      %240 = sbr.rel (%p237) target = $region48
    $region47: #{_lambda_.7} parent=5 // pred_region
      %s241 = ssub.s32 %s13, 1
      %p242 = scmp.lt.s32.totalorder %s18, 1
      %s243 = scalar_select %p242, %s18, 1
      %s244 = smul.addr %s243, 8
      %s245 = scalar_lea.vmem %s0, %s244
      %p246 = pneg %p39
      %p247 = pneg %p36
      %p248 = pneg %p60
      %p249 = pneg %p57
      %p250 = pneg %p81
      %p251 = pneg %p78
      %p252 = pneg %p102
      %p253 = pneg %p99
      %p254 = pneg %p123
      %p255 = pneg %p120
      %p256 = pneg %p144
      %p257 = pneg %p141
      %p258 = pneg %p165
      %p259 = pneg %p162
      %p260 = pneg %p191
      %p261 = pneg %p188
      %p262 = scmp.lt.s32.totalorder %s18, 1
      %s263 = scalar_select %p262, %s18, 1
      %s264 = smul.addr %s263, 8
      %s265 = scalar_lea.vmem %s7, %s264
      %p266 = scmp.lt.s32.totalorder %s18, 1
      %s267 = scalar_select %p266, %s18, 1
      %s268 = smul.addr %s267, 8
      %s269 = scalar_lea.vmem %s0, %s268
      %p270 = scmp.lt.s32.totalorder %s18, 1
      %s271 = scalar_select %p270, %s18, 1
      %s272 = smul.addr %s271, 8
      %s273 = scalar_lea.vmem %s7, %s272
      %v275 = vld [vmem:[%s269] sm:$0x1f]
      %vm276 = vcmask 1044480
      %v277 = vsel %vm276, %v275, 0.0
      %278 = vadd.xlane.f32.xlu0 %v277
      %v279 = vpop.xlane.xlu0 %278
      %v280 = vrcp.pop 128.0
      %v281 = vmul.f32 %v279, %v280
      %v282 = vsub.f32 %v275, %v281
      %v283 = vmul.f32 %v282, %v282
      %v284 = vsel %vm276, %v283, 0.0
      %285 = vadd.xlane.f32.xlu0 %v284
      %v286 = vpop.xlane.xlu0 %285
      %v287 = vmul.f32 %v286, %v280
      %v288 = vadd.f32 %v287, 1e-06
      %v289 = vrsqrt.pop %v288
      %v290 = vmul.f32 %v282, %v289
      %v291 = vld [vmem:[%s1] sm:$0x1]
      %v293 = vlaneseq
      %v294 = vshrl.u32 %v293, 7
      %v295 = vsub.s32 0, %v294
      %v296 = vrot.slane %v291, %v295
      %v298 = vmul.f32 %v290, %v296
      %v299 = vld [vmem:[%s2] sm:$0x1]
      %v301 = vlaneseq
      %v302 = vshrl.u32 %v301, 7
      %v303 = vsub.s32 0, %v302
      %v304 = vrot.slane %v299, %v303
      %v306 = vadd.f32 %v298, %v304
      %v307 = vpack.c.bf16 %v306, %v306
      %v308 = vld [vmem:[%s3] sm:$0xff]
      %v309 = vld [vmem:[%s3 + $0x8] sm:$0xf]
      %v310 = vld [vmem:[%s3 + $0xc] sm:$0xff]
      %v311 = vld [vmem:[%s3 + $0x14] sm:$0xf]
      %v312 = vld [vmem:[%s3 + $0x18] sm:$0xff]
      %v313 = vld [vmem:[%s3 + $0x20] sm:$0xf]
      %v314 = vld [vmem:[%s3 + $0x24] sm:$0xff]
      %v315 = vld [vmem:[%s3 + $0x2c] sm:$0xf]
      %v316 = vld [vmem:[%s3 + $0x30] sm:$0xff]
      %v317 = vld [vmem:[%s3 + $0x38] sm:$0xf]
      %v318 = vld [vmem:[%s3 + $0x3c] sm:$0xff]
      %v319 = vld [vmem:[%s3 + $0x44] sm:$0xf]
      %v320 = vld [vmem:[%s3 + $0x48] sm:$0xff]
      %v321 = vld [vmem:[%s3 + $0x50] sm:$0xf]
      %v322 = vld [vmem:[%s3 + $0x54] sm:$0xff]
      %v323 = vld [vmem:[%s3 + $0x5c] sm:$0xf]
      %v324 = vld [vmem:[%s3 + $0x60] sm:$0xff]
      %v325 = vld [vmem:[%s3 + $0x68] sm:$0xf]
      %v326 = vld [vmem:[%s3 + $0x6c] sm:$0xff]
      %v327 = vld [vmem:[%s3 + $0x74] sm:$0xf]
      %v328 = vld [vmem:[%s3 + $0x78] sm:$0xff]
      %v329 = vld [vmem:[%s3 + $0x80] sm:$0xf]
      %v330 = vld [vmem:[%s3 + $0x84] sm:$0xff]
      %v331 = vld [vmem:[%s3 + $0x8c] sm:$0xf]
      %v332 = vld [vmem:[%s3 + $0x90] sm:$0xff]
      %v333 = vld [vmem:[%s3 + $0x98] sm:$0xf]
      %v334 = vld [vmem:[%s3 + $0x9c] sm:$0xff]
      %v335 = vld [vmem:[%s3 + $0xa4] sm:$0xf]
      %v336 = vld [vmem:[%s3 + $0xa8] sm:$0xff]
      %v337 = vld [vmem:[%s3 + $0xb0] sm:$0xf]
      %v338 = vld [vmem:[%s3 + $0xb4] sm:$0xff]
      %v339 = vld [vmem:[%s3 + $0xbc] sm:$0xf]
      %v340 = vld [vmem:[%s4] sm:$0x7]
      %v342 = vlaneseq
      %v343 = vshrl.u32 %v342, 7
      %v344 = vsub.s32 0, %v343
      %v345 = vrot.slane %v340, %v344
      %v346 = vlaneseq
      %v347 = vshrl.u32 %v346, 7
      %v348 = vsub.s32 1, %v347
      %v349 = vrot.slane %v340, %v348
      %v350 = vlaneseq
      %v351 = vshrl.u32 %v350, 7
      %v352 = vsub.s32 2, %v351
      %v353 = vrot.slane %v340, %v352
      %v389 = vunpack.c.l.b16 %v308
      %v390 = vunpack.c.h.b16 %v308
      %v391 = vunpack.c.l.b16 %v309
      %v392 = vunpack.c.l.b16 %v310
      %v393 = vunpack.c.h.b16 %v310
      %v394 = vunpack.c.l.b16 %v311
      %v395 = vunpack.c.l.b16 %v312
      %v396 = vunpack.c.h.b16 %v312
      %v397 = vunpack.c.l.b16 %v313
      %v398 = vunpack.c.l.b16 %v314
      %v399 = vunpack.c.h.b16 %v314
      %v400 = vunpack.c.l.b16 %v315
      %v401 = vunpack.c.l.b16 %v316
      %v402 = vunpack.c.h.b16 %v316
      %v403 = vunpack.c.l.b16 %v317
      %v404 = vunpack.c.l.b16 %v318
      %v405 = vunpack.c.h.b16 %v318
      %v406 = vunpack.c.l.b16 %v319
      %v407 = vunpack.c.l.b16 %v320
      %v408 = vunpack.c.h.b16 %v320
      %v409 = vunpack.c.l.b16 %v321
      %v410 = vunpack.c.l.b16 %v322
      %v411 = vunpack.c.h.b16 %v322
      %v412 = vunpack.c.l.b16 %v323
      %v413 = vunpack.c.l.b16 %v324
      %v414 = vunpack.c.h.b16 %v324
      %v415 = vunpack.c.l.b16 %v325
      %v416 = vunpack.c.l.b16 %v326
      %v417 = vunpack.c.h.b16 %v326
      %v418 = vunpack.c.l.b16 %v327
      %v419 = vunpack.c.l.b16 %v328
      %v420 = vunpack.c.h.b16 %v328
      %v421 = vunpack.c.l.b16 %v329
      %v422 = vunpack.c.l.b16 %v330
      %v423 = vunpack.c.h.b16 %v330
      %v424 = vunpack.c.l.b16 %v331
      %v425 = vunpack.c.l.b16 %v332
      %v426 = vunpack.c.h.b16 %v332
      %v427 = vunpack.c.l.b16 %v333
      %v428 = vunpack.c.l.b16 %v334
      %v429 = vunpack.c.h.b16 %v334
      %v430 = vunpack.c.l.b16 %v335
      %v431 = vunpack.c.l.b16 %v336
      %v432 = vunpack.c.h.b16 %v336
      %v433 = vunpack.c.l.b16 %v337
      %v434 = vunpack.c.l.b16 %v338
      %v435 = vunpack.c.h.b16 %v338
      %v436 = vunpack.c.l.b16 %v339
      %v437 = vpack.c.b16 %v392, %v389
      %v438 = vpack.c.b16 %v393, %v390
      %v439 = vpack.c.b16 %v394, %v391
      %v440 = vpack.c.b16 %v398, %v395
      %v441 = vpack.c.b16 %v399, %v396
      %v442 = vpack.c.b16 %v400, %v397
      %v443 = vpack.c.b16 %v404, %v401
      %v444 = vpack.c.b16 %v405, %v402
      %v445 = vpack.c.b16 %v406, %v403
      %v446 = vpack.c.b16 %v410, %v407
      %v447 = vpack.c.b16 %v411, %v408
      %v448 = vpack.c.b16 %v412, %v409
      %v449 = vpack.c.b16 %v416, %v413
      %v450 = vpack.c.b16 %v417, %v414
      %v451 = vpack.c.b16 %v418, %v415
      %v452 = vpack.c.b16 %v422, %v419
      %v453 = vpack.c.b16 %v423, %v420
      %v454 = vpack.c.b16 %v424, %v421
      %v455 = vpack.c.b16 %v428, %v425
      %v456 = vpack.c.b16 %v429, %v426
      %v457 = vpack.c.b16 %v430, %v427
      %v458 = vpack.c.b16 %v434, %v431
      %v459 = vpack.c.b16 %v435, %v432
      %v460 = vpack.c.b16 %v436, %v433
      %485 = vmatprep.subr.bf16.mxu0 %v438
      %486 = vmatpush1.bf16.msra.mxu0 %v437
      %487 = vmatprep.subr.bf16.mxu0 %v441
      %488 = vmatpush1.bf16.msra.mxu0 %v440
      %489 = vmatprep.subr.bf16.mxu0 %v444
      %490 = vmatpush1.bf16.msra.mxu0 %v443
      %491 = vmatprep.subr.bf16.mxu0 %v447
      %492 = vmatpush1.bf16.msra.mxu0 %v446
      %493 = vmatprep.subr.bf16.mxu0 %v450
      %494 = vmatpush1.bf16.msra.mxu0 %v449
      %495 = vmatprep.subr.bf16.mxu0 %v453
      %496 = vmatpush1.bf16.msra.mxu0 %v452
      %497 = vmatprep.subr.bf16.mxu0 %v456
      %498 = vmatpush1.bf16.msra.mxu0 %v455
      %499 = vmatprep.subr.bf16.mxu0 %v459
      %500 = vmatpush1.bf16.msra.mxu0 %v458
      %501 = vmatprep.subr.bf16.mxu0 0
      %502 = vmatpush1.bf16.msra.mxu0 0
      %503 = vmatprep.subr.bf16.mxu0 0
      %504 = vmatpush1.bf16.msra.mxu0 0
      %505 = vmatprep.subr.bf16.mxu0 0
      %506 = vmatpush1.bf16.msra.mxu0 0
      %507 = vmatprep.subr.bf16.mxu0 0
      %508 = vmatpush1.bf16.msra.mxu0 0
      %509 = vmatprep.subr.bf16.mxu0 0
      %510 = vmatpush1.bf16.msra.mxu0 0
      %511 = vmatprep.subr.bf16.mxu0 0
      %512 = vmatpush1.bf16.msra.mxu0 0
      %513 = vmatprep.subr.bf16.mxu0 0
      %514 = vmatpush1.bf16.msra.mxu0 0
      %515 = vmatprep.subr.bf16.mxu0 0
      %516 = vmatpush1.bf16.msra.mxu0 0
      %517 = vmatprep.mubr.bf16.mxu0 0
      %518 = vmatmul.mubr.bf16.gmra.mrb[0].mxu0 %v307
      %v519 = vpop.f32.mrb[0].mxu0
      %v520 = vadd.f32 %v345, %v519
      %v521 = vpop.f32.mrb[0].mxu0
      %v522 = vadd.f32 %v349, %v521
      %v523 = vpop.f32.mrb[0].mxu0
      %v524 = vpop.f32.mrb[0].mxu0
      %525 = vdwg.mxu0
      %526 = vmatprep.subr.bf16.mxu0 0
      %527 = vmatpush1.bf16.msra.mxu0 %v439
      %528 = vmatprep.subr.bf16.mxu0 0
      %529 = vmatpush1.bf16.msra.mxu0 %v442
      %530 = vmatprep.subr.bf16.mxu0 0
      %531 = vmatpush1.bf16.msra.mxu0 %v445
      %532 = vmatprep.subr.bf16.mxu0 0
      %533 = vmatpush1.bf16.msra.mxu0 %v448
      %534 = vmatprep.subr.bf16.mxu0 0
      %535 = vmatpush1.bf16.msra.mxu0 %v451
      %536 = vmatprep.subr.bf16.mxu0 0
      %537 = vmatpush1.bf16.msra.mxu0 %v454
      %538 = vmatprep.subr.bf16.mxu0 0
      %539 = vmatpush1.bf16.msra.mxu0 %v457
      %540 = vmatprep.subr.bf16.mxu0 0
      %541 = vmatpush1.bf16.msra.mxu0 %v460
      %542 = vmatprep.subr.bf16.mxu0 0
      %543 = vmatpush1.bf16.msra.mxu0 0
      %544 = vmatprep.subr.bf16.mxu0 0
      %545 = vmatpush1.bf16.msra.mxu0 0
      %546 = vmatprep.subr.bf16.mxu0 0
      %547 = vmatpush1.bf16.msra.mxu0 0
      %548 = vmatprep.subr.bf16.mxu0 0
      %549 = vmatpush1.bf16.msra.mxu0 0
      %550 = vmatprep.subr.bf16.mxu0 0
      %551 = vmatpush1.bf16.msra.mxu0 0
      %552 = vmatprep.subr.bf16.mxu0 0
      %553 = vmatpush1.bf16.msra.mxu0 0
      %554 = vmatprep.subr.bf16.mxu0 0
      %555 = vmatpush1.bf16.msra.mxu0 0
      %556 = vmatprep.subr.bf16.mxu0 0
      %557 = vmatpush1.bf16.msra.mxu0 0
      %558 = vmatprep.mubr.bf16.mxu0 0
      %559 = vmatmul.mubr.bf16.gmra.mrb[0].mxu0 %v307
      %v560 = vpop.f32.mrb[0].mxu0
      %v561 = vadd.f32 %v353, %v560
      %v562 = vpop.f32.mrb[0].mxu0
      %v563 = vpop.f32.mrb[0].mxu0
      %v564 = vpop.f32.mrb[0].mxu0
      %565 = vdwg.mxu0
      %v566 = vld [vmem:[%s6] sm:$0x1]
      %v568 = vlaneseq
      %v569 = vshrl.u32 %v568, 7
      %v570 = vsub.s32 0, %v569
      %v571 = vrot.slane %v566, %v570
      %v573 = vmul.f32 %v520, 0.125
      %v574 = vpack.c.bf16 %v573, %v573
      %v575 = vpack.c.bf16 %v522, %v522
      %vm576 = vcmask 523264
      %v578 = vsel %vm576, %v574, 0
      %v581 = vsel %vm576, %v575, 0
      %583 = vmatprep.subr.bf16.mxu0 0
      %584 = vmatpush1.bf16.xpose.msra.mxu0 %v581
      %585 = vmatprep.subr.bf16.mxu0 0
      %586 = vmatpush1.bf16.xpose.msra.mxu0 0
      %587 = vmatprep.subr.bf16.mxu0 0
      %588 = vmatpush1.bf16.xpose.msra.mxu0 0
      %589 = vmatprep.subr.bf16.mxu0 0
      %590 = vmatpush1.bf16.xpose.msra.mxu0 0
      %591 = vmatprep.subr.bf16.mxu0 0
      %592 = vmatpush1.bf16.xpose.msra.mxu0 0
      %593 = vmatprep.subr.bf16.mxu0 0
      %594 = vmatpush1.bf16.xpose.msra.mxu0 0
      %595 = vmatprep.subr.bf16.mxu0 0
      %596 = vmatpush1.bf16.xpose.msra.mxu0 0
      %597 = vmatprep.subr.bf16.mxu0 0
      %598 = vmatpush1.bf16.xpose.msra.mxu0 0
      %599 = vmatprep.subr.bf16.mxu0 0
      %600 = vmatpush1.bf16.xpose.msra.mxu0 0
      %601 = vmatprep.subr.bf16.mxu0 0
      %602 = vmatpush1.bf16.xpose.msra.mxu0 0
      %603 = vmatprep.subr.bf16.mxu0 0
      %604 = vmatpush1.bf16.xpose.msra.mxu0 0
      %605 = vmatprep.subr.bf16.mxu0 0
      %606 = vmatpush1.bf16.xpose.msra.mxu0 0
      %607 = vmatprep.subr.bf16.mxu0 0
      %608 = vmatpush1.bf16.xpose.msra.mxu0 0
      %609 = vmatprep.subr.bf16.mxu0 0
      %610 = vmatpush1.bf16.xpose.msra.mxu0 0
      %611 = vmatprep.subr.bf16.mxu0 0
      %612 = vmatpush1.bf16.xpose.msra.mxu0 0
      %613 = vmatprep.subr.bf16.mxu0 0
      %614 = vmatpush1.bf16.xpose.msra.mxu0 0
      %615 = vmatprep.mubr.bf16.mxu0 0
      %616 = vmatmul.mubr.bf16.gmra.mrb[0].mxu0 %v578
      %v617 = vpop.f32.mrb[0].mxu0
      %v618 = vadd.f32 0.0, %v617
      %v619 = vpop.f32.mrb[0].mxu0
      %v620 = vpop.f32.mrb[0].mxu0
      %v621 = vpop.f32.mrb[0].mxu0
      %622 = vdwg.mxu0
      %vm623 = vcmask 36864
      %v624 = vsel %vm623, %v618, -inf
      %625 = vmax.xlane.f32.xlu0 %v624
      %v626 = vpop.xlane.xlu0 %625
      %v627 = vsub.f32 %v618, %v626
      %v628 = vmul.f32 %v627, 1.442695
      %v629 = vpow.pop %v628
      %v630 = vsel %vm623, %v629, 0.0
      %631 = vadd.xlane.f32.xlu0 %v630
      %v632 = vpop.xlane.xlu0 %631
      %v633 = vrcp.pop %v632
      %v634 = vmul.f32 %v629, %v633
      %v635 = vpack.c.bf16 %v634, %v634
      %v636 = vpack.c.bf16 %v561, %v561
      %vm637 = vcmask 39936
      %v639 = vsel %vm637, %v635, 0
      %vm641 = vcmask 1041408
      %vm642 = vcmask 1042432
      %v643 = vsel %vm641, 4294967295, 65535
      %v644 = vsel %vm642, %v643, 0
      %v646 = vand.u32 %v636, %v644
      %648 = vmatprep.subr.bf16.mxu0 0
      %649 = vmatpush1.bf16.msra.mxu0 %v646
      %650 = vmatprep.subr.bf16.mxu0 0
      %651 = vmatpush1.bf16.msra.mxu0 0
      %652 = vmatprep.subr.bf16.mxu0 0
      %653 = vmatpush1.bf16.msra.mxu0 0
      %654 = vmatprep.subr.bf16.mxu0 0
      %655 = vmatpush1.bf16.msra.mxu0 0
      %656 = vmatprep.subr.bf16.mxu0 0
      %657 = vmatpush1.bf16.msra.mxu0 0
      %658 = vmatprep.subr.bf16.mxu0 0
      %659 = vmatpush1.bf16.msra.mxu0 0
      %660 = vmatprep.subr.bf16.mxu0 0
      %661 = vmatpush1.bf16.msra.mxu0 0
      %662 = vmatprep.subr.bf16.mxu0 0
      %663 = vmatpush1.bf16.msra.mxu0 0
      %664 = vmatprep.subr.bf16.mxu0 0
      %665 = vmatpush1.bf16.msra.mxu0 0
      %666 = vmatprep.subr.bf16.mxu0 0
      %667 = vmatpush1.bf16.msra.mxu0 0
      %668 = vmatprep.subr.bf16.mxu0 0
      %669 = vmatpush1.bf16.msra.mxu0 0
      %670 = vmatprep.subr.bf16.mxu0 0
      %671 = vmatpush1.bf16.msra.mxu0 0
      %672 = vmatprep.subr.bf16.mxu0 0
      %673 = vmatpush1.bf16.msra.mxu0 0
      %674 = vmatprep.subr.bf16.mxu0 0
      %675 = vmatpush1.bf16.msra.mxu0 0
      %676 = vmatprep.subr.bf16.mxu0 0
      %677 = vmatpush1.bf16.msra.mxu0 0
      %678 = vmatprep.subr.bf16.mxu0 0
      %679 = vmatpush1.bf16.msra.mxu0 0
      %680 = vmatprep.mubr.bf16.mxu0 0
      %681 = vmatmul.mubr.bf16.gmra.mrb[0].mxu0 %v639
      %v682 = vpop.f32.mrb[0].mxu0
      %v683 = vadd.f32 0.0, %v682
      %v684 = vpop.f32.mrb[0].mxu0
      %v685 = vpop.f32.mrb[0].mxu0
      %v686 = vpop.f32.mrb[0].mxu0
      %687 = vdwg.mxu0
      %v688 = vpack.c.bf16 %v683, %v683
      %v689 = vld [vmem:[%s5] sm:$0xf]
      %v690 = vld [vmem:[%s5 + $0x4] sm:$0xf]
      %v691 = vld [vmem:[%s5 + $0x8] sm:$0xf]
      %v692 = vld [vmem:[%s5 + $0xc] sm:$0xf]
      %v693 = vld [vmem:[%s5 + $0x10] sm:$0xf]
      %v694 = vld [vmem:[%s5 + $0x14] sm:$0xf]
      %v695 = vld [vmem:[%s5 + $0x18] sm:$0xf]
      %v696 = vld [vmem:[%s5 + $0x1c] sm:$0xf]
      %v705 = vunpack.c.l.b16 %v689
      %v706 = vunpack.c.l.b16 %v690
      %v707 = vunpack.c.l.b16 %v691
      %v708 = vunpack.c.l.b16 %v692
      %v709 = vunpack.c.l.b16 %v693
      %v710 = vunpack.c.l.b16 %v694
      %v711 = vunpack.c.l.b16 %v695
      %v712 = vunpack.c.l.b16 %v696
      %v713 = vpack.c.b16 %v706, %v705
      %v714 = vpack.c.b16 %v708, %v707
      %v715 = vpack.c.b16 %v710, %v709
      %v716 = vpack.c.b16 %v712, %v711
      %v722 = vsel %vm576, %v688, 0
      %724 = vmatprep.subr.bf16.mxu0 0
      %725 = vmatpush1.bf16.msra.mxu0 %v713
      %726 = vmatprep.subr.bf16.mxu0 0
      %727 = vmatpush1.bf16.msra.mxu0 %v714
      %728 = vmatprep.subr.bf16.mxu0 0
      %729 = vmatpush1.bf16.msra.mxu0 %v715
      %730 = vmatprep.subr.bf16.mxu0 0
      %731 = vmatpush1.bf16.msra.mxu0 %v716
      %732 = vmatprep.subr.bf16.mxu0 0
      %733 = vmatpush1.bf16.msra.mxu0 0
      %734 = vmatprep.subr.bf16.mxu0 0
      %735 = vmatpush1.bf16.msra.mxu0 0
      %736 = vmatprep.subr.bf16.mxu0 0
      %737 = vmatpush1.bf16.msra.mxu0 0
      %738 = vmatprep.subr.bf16.mxu0 0
      %739 = vmatpush1.bf16.msra.mxu0 0
      %740 = vmatprep.subr.bf16.mxu0 0
      %741 = vmatpush1.bf16.msra.mxu0 0
      %742 = vmatprep.subr.bf16.mxu0 0
      %743 = vmatpush1.bf16.msra.mxu0 0
      %744 = vmatprep.subr.bf16.mxu0 0
      %745 = vmatpush1.bf16.msra.mxu0 0
      %746 = vmatprep.subr.bf16.mxu0 0
      %747 = vmatpush1.bf16.msra.mxu0 0
      %748 = vmatprep.subr.bf16.mxu0 0
      %749 = vmatpush1.bf16.msra.mxu0 0
      %750 = vmatprep.subr.bf16.mxu0 0
      %751 = vmatpush1.bf16.msra.mxu0 0
      %752 = vmatprep.subr.bf16.mxu0 0
      %753 = vmatpush1.bf16.msra.mxu0 0
      %754 = vmatprep.subr.bf16.mxu0 0
      %755 = vmatpush1.bf16.msra.mxu0 0
      %756 = vmatprep.mubr.bf16.mxu0 0
      %757 = vmatmul.mubr.bf16.gmra.mrb[0].mxu0 %v722
      %v758 = vpop.f32.mrb[0].mxu0
      %v759 = vadd.f32 0.0, %v758
      %v760 = vpop.f32.mrb[0].mxu0
      %v761 = vpop.f32.mrb[0].mxu0
      %v762 = vpop.f32.mrb[0].mxu0
      %763 = vdwg.mxu0
      %v764 = vadd.f32 %v571, %v759
      %766 = vrot.lane.b32.xlu0 %v574, 64
      %v767 = vpop.permute.xlu0 %766
      %769 = vrot.lane.b32.xlu0 %v575, 64
      %v770 = vpop.permute.xlu0 %769
      %v772 = vsel %vm576, %v767, 0
      %v775 = vsel %vm576, %v770, 0
      %777 = vmatprep.subr.bf16.mxu0 0
      %778 = vmatpush1.bf16.xpose.msra.mxu0 %v775
      %779 = vmatprep.subr.bf16.mxu0 0
      %780 = vmatpush1.bf16.xpose.msra.mxu0 0
      %781 = vmatprep.subr.bf16.mxu0 0
      %782 = vmatpush1.bf16.xpose.msra.mxu0 0
      %783 = vmatprep.subr.bf16.mxu0 0
      %784 = vmatpush1.bf16.xpose.msra.mxu0 0
      %785 = vmatprep.subr.bf16.mxu0 0
      %786 = vmatpush1.bf16.xpose.msra.mxu0 0
      %787 = vmatprep.subr.bf16.mxu0 0
      %788 = vmatpush1.bf16.xpose.msra.mxu0 0
      %789 = vmatprep.subr.bf16.mxu0 0
      %790 = vmatpush1.bf16.xpose.msra.mxu0 0
      %791 = vmatprep.subr.bf16.mxu0 0
      %792 = vmatpush1.bf16.xpose.msra.mxu0 0
      %793 = vmatprep.subr.bf16.mxu0 0
      %794 = vmatpush1.bf16.xpose.msra.mxu0 0
      %795 = vmatprep.subr.bf16.mxu0 0
      %796 = vmatpush1.bf16.xpose.msra.mxu0 0
      %797 = vmatprep.subr.bf16.mxu0 0
      %798 = vmatpush1.bf16.xpose.msra.mxu0 0
      %799 = vmatprep.subr.bf16.mxu0 0
      %800 = vmatpush1.bf16.xpose.msra.mxu0 0
      %801 = vmatprep.subr.bf16.mxu0 0
      %802 = vmatpush1.bf16.xpose.msra.mxu0 0
      %803 = vmatprep.subr.bf16.mxu0 0
      %804 = vmatpush1.bf16.xpose.msra.mxu0 0
      %805 = vmatprep.subr.bf16.mxu0 0
      %806 = vmatpush1.bf16.xpose.msra.mxu0 0
      %807 = vmatprep.subr.bf16.mxu0 0
      %808 = vmatpush1.bf16.xpose.msra.mxu0 0
      %809 = vmatprep.mubr.bf16.mxu0 0
      %810 = vmatmul.mubr.bf16.gmra.mrb[0].mxu0 %v772
      %v811 = vpop.f32.mrb[0].mxu0
      %v812 = vadd.f32 0.0, %v811
      %v813 = vpop.f32.mrb[0].mxu0
      %v814 = vpop.f32.mrb[0].mxu0
      %v815 = vpop.f32.mrb[0].mxu0
      %816 = vdwg.mxu0
      %v817 = vsel %vm623, %v812, -inf
      %818 = vmax.xlane.f32.xlu0 %v817
      %v819 = vpop.xlane.xlu0 %818
      %v820 = vsub.f32 %v812, %v819
      %v821 = vmul.f32 %v820, 1.442695
      %v822 = vpow.pop %v821
      %v823 = vsel %vm623, %v822, 0.0
      %824 = vadd.xlane.f32.xlu0 %v823
      %v825 = vpop.xlane.xlu0 %824
      %v826 = vrcp.pop %v825
      %v827 = vmul.f32 %v822, %v826
      %v828 = vpack.c.bf16 %v827, %v827
      %830 = vrot.lane.b32.xlu0 %v636, 64
      %v831 = vpop.permute.xlu0 %830
      %v833 = vsel %vm637, %v828, 0
      %v836 = vand.u32 %v831, %v644
      %838 = vmatprep.subr.bf16.mxu0 0
      %839 = vmatpush1.bf16.msra.mxu0 %v836
      %840 = vmatprep.subr.bf16.mxu0 0
      %841 = vmatpush1.bf16.msra.mxu0 0
      %842 = vmatprep.subr.bf16.mxu0 0
      %843 = vmatpush1.bf16.msra.mxu0 0
      %844 = vmatprep.subr.bf16.mxu0 0
      %845 = vmatpush1.bf16.msra.mxu0 0
      %846 = vmatprep.subr.bf16.mxu0 0
      %847 = vmatpush1.bf16.msra.mxu0 0
      %848 = vmatprep.subr.bf16.mxu0 0
      %849 = vmatpush1.bf16.msra.mxu0 0
      %850 = vmatprep.subr.bf16.mxu0 0
      %851 = vmatpush1.bf16.msra.mxu0 0
      %852 = vmatprep.subr.bf16.mxu0 0
      %853 = vmatpush1.bf16.msra.mxu0 0
      %854 = vmatprep.subr.bf16.mxu0 0
      %855 = vmatpush1.bf16.msra.mxu0 0
      %856 = vmatprep.subr.bf16.mxu0 0
      %857 = vmatpush1.bf16.msra.mxu0 0
      %858 = vmatprep.subr.bf16.mxu0 0
      %859 = vmatpush1.bf16.msra.mxu0 0
      %860 = vmatprep.subr.bf16.mxu0 0
      %861 = vmatpush1.bf16.msra.mxu0 0
      %862 = vmatprep.subr.bf16.mxu0 0
      %863 = vmatpush1.bf16.msra.mxu0 0
      %864 = vmatprep.subr.bf16.mxu0 0
      %865 = vmatpush1.bf16.msra.mxu0 0
      %866 = vmatprep.subr.bf16.mxu0 0
      %867 = vmatpush1.bf16.msra.mxu0 0
      %868 = vmatprep.subr.bf16.mxu0 0
      %869 = vmatpush1.bf16.msra.mxu0 0
      %870 = vmatprep.mubr.bf16.mxu0 0
      %871 = vmatmul.mubr.bf16.gmra.mrb[0].mxu0 %v833
      %v872 = vpop.f32.mrb[0].mxu0
      %v873 = vadd.f32 0.0, %v872
      %v874 = vpop.f32.mrb[0].mxu0
      %v875 = vpop.f32.mrb[0].mxu0
      %v876 = vpop.f32.mrb[0].mxu0
      %877 = vdwg.mxu0
      %v878 = vpack.c.bf16 %v873, %v873
      %v879 = vld [vmem:[%s5 + $0x20] sm:$0xf]
      %v880 = vld [vmem:[%s5 + $0x24] sm:$0xf]
      %v881 = vld [vmem:[%s5 + $0x28] sm:$0xf]
      %v882 = vld [vmem:[%s5 + $0x2c] sm:$0xf]
      %v883 = vld [vmem:[%s5 + $0x30] sm:$0xf]
      %v884 = vld [vmem:[%s5 + $0x34] sm:$0xf]
      %v885 = vld [vmem:[%s5 + $0x38] sm:$0xf]
      %v886 = vld [vmem:[%s5 + $0x3c] sm:$0xf]
      %v895 = vunpack.c.l.b16 %v879
      %v896 = vunpack.c.l.b16 %v880
      %v897 = vunpack.c.l.b16 %v881
      %v898 = vunpack.c.l.b16 %v882
      %v899 = vunpack.c.l.b16 %v883
      %v900 = vunpack.c.l.b16 %v884
      %v901 = vunpack.c.l.b16 %v885
      %v902 = vunpack.c.l.b16 %v886
      %v903 = vpack.c.b16 %v896, %v895
      %v904 = vpack.c.b16 %v898, %v897
      %v905 = vpack.c.b16 %v900, %v899
      %v906 = vpack.c.b16 %v902, %v901
      %v912 = vsel %vm576, %v878, 0
      %914 = vmatprep.subr.bf16.mxu0 0
      %915 = vmatpush1.bf16.msra.mxu0 %v903
      %916 = vmatprep.subr.bf16.mxu0 0
      %917 = vmatpush1.bf16.msra.mxu0 %v904
      %918 = vmatprep.subr.bf16.mxu0 0
      %919 = vmatpush1.bf16.msra.mxu0 %v905
      %920 = vmatprep.subr.bf16.mxu0 0
      %921 = vmatpush1.bf16.msra.mxu0 %v906
      %922 = vmatprep.subr.bf16.mxu0 0
      %923 = vmatpush1.bf16.msra.mxu0 0
      %924 = vmatprep.subr.bf16.mxu0 0
      %925 = vmatpush1.bf16.msra.mxu0 0
      %926 = vmatprep.subr.bf16.mxu0 0
      %927 = vmatpush1.bf16.msra.mxu0 0
      %928 = vmatprep.subr.bf16.mxu0 0
      %929 = vmatpush1.bf16.msra.mxu0 0
      %930 = vmatprep.subr.bf16.mxu0 0
      %931 = vmatpush1.bf16.msra.mxu0 0
      %932 = vmatprep.subr.bf16.mxu0 0
      %933 = vmatpush1.bf16.msra.mxu0 0
      %934 = vmatprep.subr.bf16.mxu0 0
      %935 = vmatpush1.bf16.msra.mxu0 0
      %936 = vmatprep.subr.bf16.mxu0 0
      %937 = vmatpush1.bf16.msra.mxu0 0
      %938 = vmatprep.subr.bf16.mxu0 0
      %939 = vmatpush1.bf16.msra.mxu0 0
      %940 = vmatprep.subr.bf16.mxu0 0
      %941 = vmatpush1.bf16.msra.mxu0 0
      %942 = vmatprep.subr.bf16.mxu0 0
      %943 = vmatpush1.bf16.msra.mxu0 0
      %944 = vmatprep.subr.bf16.mxu0 0
      %945 = vmatpush1.bf16.msra.mxu0 0
      %946 = vmatprep.mubr.bf16.mxu0 0
      %947 = vmatmul.mubr.bf16.gmra.mrb[0].mxu0 %v912
      %v948 = vpop.f32.mrb[0].mxu0
      %v949 = vadd.f32 0.0, %v948
      %v950 = vpop.f32.mrb[0].mxu0
      %v951 = vpop.f32.mrb[0].mxu0
      %v952 = vpop.f32.mrb[0].mxu0
      %953 = vdwg.mxu0
      %v954 = vadd.f32 %v764, %v949
      %v955 = vadd.f32 %v275, %v954
      %956 = vst [vmem:[%s273] sm:$0x1f] %v955
      %p957 = scmp.lt.s32.totalorder %s18, 1
      %s958 = scalar_select %p957, %s18, 1
      %s959 = smul.addr %s958, 8
      %s960 = scalar_lea.vmem %s7, %s959
      // Predicated region
      $region49: #{_lambda_.7} parent=47 // pred_check
        %p961 = pneg %p188
      $region50: #{_lambda_.7} parent=47 // pred_check_branch
        %963 = sbr.rel (%p961) target = $region52
      $region51: #{_lambda_.7} parent=47 // pred_region
        _
      $region52: #{_lambda_.7} parent=47 // pred_fallthru
        _
    $region48: #{_lambda_.7} parent=5 // pred_fallthru
      _
    %p964 = scmp.le.s32.totalorder 2, %s13
    // Predicated region
    $region53: #{_lambda_.7} parent=5 // pred_check
      %p965 = pneg %p964
    $region54: #{_lambda_.7} parent=5 // pred_check_branch
      %967 = sbr.rel (%p965) target = $region56
    $region55: #{_lambda_.7} parent=5 // pred_region
      %s968 = ssub.s32 %s13, 2
      // Predicated region
      $region57: #{_lambda_.7} parent=55 // pred_check
        %p969 = pneg %p194
      $region58: #{_lambda_.7} parent=55 // pred_check_branch
        %971 = sbr.rel (%p969) target = $region60
      $region59: #{_lambda_.7} parent=55 // pred_region
        %p972 = scmp.lt.s32.totalorder %s19, 1
        %s973 = scalar_select %p972, %s19, 1
        %s974 = smul.addr %s973, 8
        %s975 = scalar_lea.vmem %s7, %s974
      $region60: #{_lambda_.7} parent=55 // pred_fallthru
        _
    $region56: #{_lambda_.7} parent=5 // pred_fallthru
      _
  $region6: #{_lambda_.7} parent=0 // loop_footer
    %s17 = sadd.s32 1, %s13
  $region7: #{_lambda_.7} parent=0 // loop_footer_branch
    %12 = sbr.rel target = $region3
  $region8: #{_lambda_.7} parent=0 // loop_exit
    _

// kernel: _lambda_.8
$region0: #{_lambda_.8}
  #allocation0 [shape = 'u32[]', space=smem, size = 0x4, offset = 0x4, fixed_abs, tag = 'smem constant byte address 0x4 - core index']
  #allocation1 [shape = 'u32[144,128]{1,0:T(1,128)}', space=vmem, size = 0x12000, scoped, tag = 'internal scratch']
  %s0 = inlined_call_operand.vmem [shape: f32[2,5,128], index: 0, kind: input, shape index: {}]
  %s1 = inlined_call_operand.vmem [shape: f32[1,128], index: 1, kind: input, shape index: {}]
  %s2 = inlined_call_operand.vmem [shape: f32[1,128], index: 2, kind: input, shape index: {}]
  %s3 = inlined_call_operand.vmem [shape: bf16[128,512], index: 3, kind: input, shape index: {}]
  %s4 = inlined_call_operand.vmem [shape: f32[1,512], index: 4, kind: input, shape index: {}]
  %s5 = inlined_call_operand.vmem [shape: bf16[512,128], index: 5, kind: input, shape index: {}]
  %s6 = inlined_call_operand.vmem [shape: f32[1,128], index: 6, kind: input, shape index: {}]
  %s7 = inlined_call_operand.vmem [shape: f32[2,5,128], index: 7, kind: output, shape index: {}]
  %s8 = sld [smem:[#allocation0]]
  $region61: #{_lambda_.8} parent=0
    _
  %s10 = ssub.s32 1, %s8
  %s11 = scalar_select 0, %s10, %s8
  loop: start=0, step=1, limit=4
  $region2: #{_lambda_.8} parent=0 // loop_pre_header
    _
  $region3: #{_lambda_.8} parent=0 // loop_header
    %s13 = sphi 0, %s17
    %p14 = scmp.ge.s32.totalorder %s13, 4
    %s23 = sphi 0, %s25
    %s26 = sphi 0, %s23
    %s27 = sphi 0, %s26
    %s43 = sphi 0, %s27
    %s47 = sphi 0, %s47
    %s49 = sphi 0, %s47
    %s50 = sphi 0, %s49
    %s64 = sphi 0, %s50
    %s68 = sphi 0, %s68
    %s70 = sphi 0, %s68
    %s71 = sphi 0, %s70
    %s85 = sphi 0, %s71
    %s89 = sphi 0, %s89
    %s91 = sphi 0, %s89
    %s92 = sphi 0, %s91
    %s106 = sphi 0, %s92
    %s110 = sphi 0, %s110
    %s112 = sphi 0, %s110
    %s113 = sphi 0, %s112
    %s127 = sphi 0, %s113
    %s131 = sphi 0, %s131
    %s133 = sphi 0, %s131
    %s134 = sphi 0, %s133
    %s148 = sphi 0, %s134
    %s152 = sphi 0, %s152
    %s154 = sphi 0, %s152
    %s155 = sphi 0, %s154
    %s169 = sphi 0, %s155
    %s175 = sphi 0, %s177
    %s178 = sphi 0, %s175
    %s179 = sphi 0, %s178
    %s195 = sphi 0, %s179
  $region4: #{_lambda_.8} parent=0 // loop_header_branch
    %16 = sbr.rel (%p14) target = $region8
  $region5: #{_lambda_.8} parent=0 // loop_body
    %s18 = ssub.s32 %s13, 1
    %s19 = ssub.s32 %s13, 2
    %s20 = sadd.s32 %s13, 1
    %s21 = ssub.s32 %s13, %s20
    %p22 = scmp.eq.s32.totalorder %s21, 0
    %s24 = sadd.s32 %s23, 1
    %s25 = scalar_select %p22, %s23, %s24
    %p28 = pneg %p22
    %p29 = scmp.eq.s32.totalorder %s13, 1
    %p30 = por %p28, %p29
    %p31 = scmp.ne.s32.totalorder %s23, %s26
    %p32 = scmp.eq.s32.totalorder %s13, 0
    %p33 = por %p31, %p32
    %p34 = scmp.ne.s32.totalorder %s23, %s26
    %p35 = scmp.eq.s32.totalorder %s18, 1
    %p36 = por %p34, %p35
    %p37 = scmp.ne.s32.totalorder %s26, %s27
    %p38 = scmp.eq.s32.totalorder %s18, 0
    %p39 = por %p37, %p38
    %p40 = scmp.ne.s32.totalorder %s26, %s27
    %p41 = scmp.eq.s32.totalorder %s19, 1
    %p42 = por %p40, %p41
    %p44 = scmp.ne.s32.totalorder %s27, %s43
    %p45 = scmp.eq.s32.totalorder %s19, 0
    %p46 = por %p44, %p45
    %s48 = sadd.s32 %s47, 1
    %p51 = scmp.eq.s32.totalorder %s13, 1
    %p52 = scmp.ne.s32.totalorder %s47, %s49
    %p53 = scmp.eq.s32.totalorder %s13, 0
    %p54 = por %p52, %p53
    %p55 = scmp.ne.s32.totalorder %s47, %s49
    %p56 = scmp.eq.s32.totalorder %s18, 1
    %p57 = por %p55, %p56
    %p58 = scmp.ne.s32.totalorder %s49, %s50
    %p59 = scmp.eq.s32.totalorder %s18, 0
    %p60 = por %p58, %p59
    %p61 = scmp.ne.s32.totalorder %s49, %s50
    %p62 = scmp.eq.s32.totalorder %s19, 1
    %p63 = por %p61, %p62
    %p65 = scmp.ne.s32.totalorder %s50, %s64
    %p66 = scmp.eq.s32.totalorder %s19, 0
    %p67 = por %p65, %p66
    %s69 = sadd.s32 %s68, 1
    %p72 = scmp.eq.s32.totalorder %s13, 1
    %p73 = scmp.ne.s32.totalorder %s68, %s70
    %p74 = scmp.eq.s32.totalorder %s13, 0
    %p75 = por %p73, %p74
    %p76 = scmp.ne.s32.totalorder %s68, %s70
    %p77 = scmp.eq.s32.totalorder %s18, 1
    %p78 = por %p76, %p77
    %p79 = scmp.ne.s32.totalorder %s70, %s71
    %p80 = scmp.eq.s32.totalorder %s18, 0
    %p81 = por %p79, %p80
    %p82 = scmp.ne.s32.totalorder %s70, %s71
    %p83 = scmp.eq.s32.totalorder %s19, 1
    %p84 = por %p82, %p83
    %p86 = scmp.ne.s32.totalorder %s71, %s85
    %p87 = scmp.eq.s32.totalorder %s19, 0
    %p88 = por %p86, %p87
    %s90 = sadd.s32 %s89, 1
    %p93 = scmp.eq.s32.totalorder %s13, 1
    %p94 = scmp.ne.s32.totalorder %s89, %s91
    %p95 = scmp.eq.s32.totalorder %s13, 0
    %p96 = por %p94, %p95
    %p97 = scmp.ne.s32.totalorder %s89, %s91
    %p98 = scmp.eq.s32.totalorder %s18, 1
    %p99 = por %p97, %p98
    %p100 = scmp.ne.s32.totalorder %s91, %s92
    %p101 = scmp.eq.s32.totalorder %s18, 0
    %p102 = por %p100, %p101
    %p103 = scmp.ne.s32.totalorder %s91, %s92
    %p104 = scmp.eq.s32.totalorder %s19, 1
    %p105 = por %p103, %p104
    %p107 = scmp.ne.s32.totalorder %s92, %s106
    %p108 = scmp.eq.s32.totalorder %s19, 0
    %p109 = por %p107, %p108
    %s111 = sadd.s32 %s110, 1
    %p114 = scmp.eq.s32.totalorder %s13, 1
    %p115 = scmp.ne.s32.totalorder %s110, %s112
    %p116 = scmp.eq.s32.totalorder %s13, 0
    %p117 = por %p115, %p116
    %p118 = scmp.ne.s32.totalorder %s110, %s112
    %p119 = scmp.eq.s32.totalorder %s18, 1
    %p120 = por %p118, %p119
    %p121 = scmp.ne.s32.totalorder %s112, %s113
    %p122 = scmp.eq.s32.totalorder %s18, 0
    %p123 = por %p121, %p122
    %p124 = scmp.ne.s32.totalorder %s112, %s113
    %p125 = scmp.eq.s32.totalorder %s19, 1
    %p126 = por %p124, %p125
    %p128 = scmp.ne.s32.totalorder %s113, %s127
    %p129 = scmp.eq.s32.totalorder %s19, 0
    %p130 = por %p128, %p129
    %s132 = sadd.s32 %s131, 1
    %p135 = scmp.eq.s32.totalorder %s13, 1
    %p136 = scmp.ne.s32.totalorder %s131, %s133
    %p137 = scmp.eq.s32.totalorder %s13, 0
    %p138 = por %p136, %p137
    %p139 = scmp.ne.s32.totalorder %s131, %s133
    %p140 = scmp.eq.s32.totalorder %s18, 1
    %p141 = por %p139, %p140
    %p142 = scmp.ne.s32.totalorder %s133, %s134
    %p143 = scmp.eq.s32.totalorder %s18, 0
    %p144 = por %p142, %p143
    %p145 = scmp.ne.s32.totalorder %s133, %s134
    %p146 = scmp.eq.s32.totalorder %s19, 1
    %p147 = por %p145, %p146
    %p149 = scmp.ne.s32.totalorder %s134, %s148
    %p150 = scmp.eq.s32.totalorder %s19, 0
    %p151 = por %p149, %p150
    %s153 = sadd.s32 %s152, 1
    %p156 = scmp.eq.s32.totalorder %s13, 1
    %p157 = scmp.ne.s32.totalorder %s152, %s154
    %p158 = scmp.eq.s32.totalorder %s13, 0
    %p159 = por %p157, %p158
    %p160 = scmp.ne.s32.totalorder %s152, %s154
    %p161 = scmp.eq.s32.totalorder %s18, 1
    %p162 = por %p160, %p161
    %p163 = scmp.ne.s32.totalorder %s154, %s155
    %p164 = scmp.eq.s32.totalorder %s18, 0
    %p165 = por %p163, %p164
    %p166 = scmp.ne.s32.totalorder %s154, %s155
    %p167 = scmp.eq.s32.totalorder %s19, 1
    %p168 = por %p166, %p167
    %p170 = scmp.ne.s32.totalorder %s155, %s169
    %p171 = scmp.eq.s32.totalorder %s19, 0
    %p172 = por %p170, %p171
    %s173 = ssub.s32 %s13, %s20
    %p174 = scmp.eq.s32.totalorder %s173, 0
    %s176 = sadd.s32 %s175, 1
    %s177 = scalar_select %p174, %s175, %s176
    %p180 = pneg %p174
    %p181 = scmp.eq.s32.totalorder %s13, 1
    %p182 = por %p180, %p181
    %p183 = scmp.ne.s32.totalorder %s175, %s178
    %p184 = scmp.eq.s32.totalorder %s13, 0
    %p185 = por %p183, %p184
    %p186 = scmp.ne.s32.totalorder %s175, %s178
    %p187 = scmp.eq.s32.totalorder %s18, 1
    %p188 = por %p186, %p187
    %p189 = scmp.ne.s32.totalorder %s178, %s179
    %p190 = scmp.eq.s32.totalorder %s18, 0
    %p191 = por %p189, %p190
    %p192 = scmp.ne.s32.totalorder %s178, %s179
    %p193 = scmp.eq.s32.totalorder %s19, 1
    %p194 = por %p192, %p193
    %p196 = scmp.ne.s32.totalorder %s179, %s195
    %p197 = scmp.eq.s32.totalorder %s19, 0
    %p198 = por %p196, %p197
    %p199 = scmp.le.s32.totalorder 1, %s13
    %p200 = scmp.lt.s32.totalorder %s13, 3
    %p201 = pnand %p199, %p200
    %p202 = pneg %p201
    // Predicated region
    $region9: #{_lambda_.8} parent=5 // pred_check
      _
    $region10: #{_lambda_.8} parent=5 // pred_check_branch
      %204 = sbr.rel (%p201) target = $region12
    $region11: #{_lambda_.8} parent=5 // pred_region
      %s205 = ssub.s32 %s13, 1
      // Predicated region
      $region13: #{_lambda_.8} parent=11 // pred_check
        %p206 = pneg %p60
      $region14: #{_lambda_.8} parent=11 // pred_check_branch
        %208 = sbr.rel (%p206) target = $region16
      $region15: #{_lambda_.8} parent=11 // pred_region
        _
      $region16: #{_lambda_.8} parent=11 // pred_fallthru
        _
      // Predicated region
      $region17: #{_lambda_.8} parent=11 // pred_check
        %p209 = pneg %p81
      $region18: #{_lambda_.8} parent=11 // pred_check_branch
        %211 = sbr.rel (%p209) target = $region20
      $region19: #{_lambda_.8} parent=11 // pred_region
        _
      $region20: #{_lambda_.8} parent=11 // pred_fallthru
        _
      // Predicated region
      $region21: #{_lambda_.8} parent=11 // pred_check
        %p212 = pneg %p102
      $region22: #{_lambda_.8} parent=11 // pred_check_branch
        %214 = sbr.rel (%p212) target = $region24
      $region23: #{_lambda_.8} parent=11 // pred_region
        _
      $region24: #{_lambda_.8} parent=11 // pred_fallthru
        _
      // Predicated region
      $region25: #{_lambda_.8} parent=11 // pred_check
        %p215 = pneg %p123
      $region26: #{_lambda_.8} parent=11 // pred_check_branch
        %217 = sbr.rel (%p215) target = $region28
      $region27: #{_lambda_.8} parent=11 // pred_region
        _
      $region28: #{_lambda_.8} parent=11 // pred_fallthru
        _
      // Predicated region
      $region29: #{_lambda_.8} parent=11 // pred_check
        %p218 = pneg %p144
      $region30: #{_lambda_.8} parent=11 // pred_check_branch
        %220 = sbr.rel (%p218) target = $region32
      $region31: #{_lambda_.8} parent=11 // pred_region
        _
      $region32: #{_lambda_.8} parent=11 // pred_fallthru
        _
      // Predicated region
      $region33: #{_lambda_.8} parent=11 // pred_check
        %p221 = pneg %p165
      $region34: #{_lambda_.8} parent=11 // pred_check_branch
        %223 = sbr.rel (%p221) target = $region36
      $region35: #{_lambda_.8} parent=11 // pred_region
        _
      $region36: #{_lambda_.8} parent=11 // pred_fallthru
        _
    $region12: #{_lambda_.8} parent=5 // pred_fallthru
      _
    %p224 = scmp.lt.s32.totalorder %s13, 2
    // Predicated region
    $region37: #{_lambda_.8} parent=5 // pred_check
      %p225 = pneg %p224
    $region38: #{_lambda_.8} parent=5 // pred_check_branch
      %227 = sbr.rel (%p225) target = $region40
    $region39: #{_lambda_.8} parent=5 // pred_region
      // Predicated region
      $region41: #{_lambda_.8} parent=39 // pred_check
        %p228 = pneg %p33
      $region42: #{_lambda_.8} parent=39 // pred_check_branch
        %230 = sbr.rel (%p228) target = $region44
      $region43: #{_lambda_.8} parent=39 // pred_region
        %p231 = scmp.lt.s32.totalorder %s13, 1
        %s232 = scalar_select %p231, %s13, 1
        %s233 = smul.addr %s232, 8
        %s234 = scalar_lea.vmem %s0, %s233
      $region44: #{_lambda_.8} parent=39 // pred_fallthru
        _
    $region40: #{_lambda_.8} parent=5 // pred_fallthru
      _
    %p235 = scmp.le.s32.totalorder 1, %s13
    %p236 = scmp.lt.s32.totalorder %s13, 3
    %p237 = pnand %p235, %p236
    %p238 = pneg %p237
    // Predicated region
    $region45: #{_lambda_.8} parent=5 // pred_check
      _
    $region46: #{_lambda_.8} parent=5 // pred_check_branch
      %240 = sbr.rel (%p237) target = $region48
    $region47: #{_lambda_.8} parent=5 // pred_region
      %s241 = ssub.s32 %s13, 1
      %p242 = scmp.lt.s32.totalorder %s18, 1
      %s243 = scalar_select %p242, %s18, 1
      %s244 = smul.addr %s243, 8
      %s245 = scalar_lea.vmem %s0, %s244
      %p246 = pneg %p39
      %p247 = pneg %p36
      %p248 = pneg %p60
      %p249 = pneg %p57
      %p250 = pneg %p81
      %p251 = pneg %p78
      %p252 = pneg %p102
      %p253 = pneg %p99
      %p254 = pneg %p123
      %p255 = pneg %p120
      %p256 = pneg %p144
      %p257 = pneg %p141
      %p258 = pneg %p165
      %p259 = pneg %p162
      %p260 = pneg %p191
      %p261 = pneg %p188
      %p262 = scmp.lt.s32.totalorder %s18, 1
      %s263 = scalar_select %p262, %s18, 1
      %s264 = smul.addr %s263, 8
      %s265 = scalar_lea.vmem %s7, %s264
      %p266 = scmp.lt.s32.totalorder %s18, 1
      %s267 = scalar_select %p266, %s18, 1
      %s268 = smul.addr %s267, 8
      %s269 = scalar_lea.vmem %s0, %s268
      %p270 = scmp.lt.s32.totalorder %s18, 1
      %s271 = scalar_select %p270, %s18, 1
      %s272 = smul.addr %s271, 8
      %s273 = scalar_lea.vmem %s7, %s272
      %v275 = vld [vmem:[%s269] sm:$0x1f]
      %vm276 = vcmask 1044480
      %v277 = vsel %vm276, %v275, 0.0
      %278 = vadd.xlane.f32.xlu0 %v277
      %v279 = vpop.xlane.xlu0 %278
      %v280 = vrcp.pop 128.0
      %v281 = vmul.f32 %v279, %v280
      %v282 = vsub.f32 %v275, %v281
      %v283 = vmul.f32 %v282, %v282
      %v284 = vsel %vm276, %v283, 0.0
      %285 = vadd.xlane.f32.xlu0 %v284
      %v286 = vpop.xlane.xlu0 %285
      %v287 = vmul.f32 %v286, %v280
      %v288 = vadd.f32 %v287, 1e-06
      %v289 = vrsqrt.pop %v288
      %v290 = vmul.f32 %v282, %v289
      %v291 = vld [vmem:[%s1] sm:$0x1]
      %v293 = vlaneseq
      %v294 = vshrl.u32 %v293, 7
      %v295 = vsub.s32 0, %v294
      %v296 = vrot.slane %v291, %v295
      %v298 = vmul.f32 %v290, %v296
      %v299 = vld [vmem:[%s2] sm:$0x1]
      %v301 = vlaneseq
      %v302 = vshrl.u32 %v301, 7
      %v303 = vsub.s32 0, %v302
      %v304 = vrot.slane %v299, %v303
      %v306 = vadd.f32 %v298, %v304
      %v307 = vpack.c.bf16 %v306, %v306
      %v308 = vld [vmem:[%s3] sm:$0xff]
      %v309 = vld [vmem:[%s3 + $0x8] sm:$0xff]
      %v310 = vld [vmem:[%s3 + $0x10] sm:$0xff]
      %v311 = vld [vmem:[%s3 + $0x18] sm:$0xff]
      %v312 = vld [vmem:[%s3 + $0x20] sm:$0xff]
      %v313 = vld [vmem:[%s3 + $0x28] sm:$0xff]
      %v314 = vld [vmem:[%s3 + $0x30] sm:$0xff]
      %v315 = vld [vmem:[%s3 + $0x38] sm:$0xff]
      %v316 = vld [vmem:[%s3 + $0x40] sm:$0xff]
      %v317 = vld [vmem:[%s3 + $0x48] sm:$0xff]
      %v318 = vld [vmem:[%s3 + $0x50] sm:$0xff]
      %v319 = vld [vmem:[%s3 + $0x58] sm:$0xff]
      %v320 = vld [vmem:[%s3 + $0x60] sm:$0xff]
      %v321 = vld [vmem:[%s3 + $0x68] sm:$0xff]
      %v322 = vld [vmem:[%s3 + $0x70] sm:$0xff]
      %v323 = vld [vmem:[%s3 + $0x78] sm:$0xff]
      %v324 = vld [vmem:[%s3 + $0x80] sm:$0xff]
      %v325 = vld [vmem:[%s3 + $0x88] sm:$0xff]
      %v326 = vld [vmem:[%s3 + $0x90] sm:$0xff]
      %v327 = vld [vmem:[%s3 + $0x98] sm:$0xff]
      %v328 = vld [vmem:[%s3 + $0xa0] sm:$0xff]
      %v329 = vld [vmem:[%s3 + $0xa8] sm:$0xff]
      %v330 = vld [vmem:[%s3 + $0xb0] sm:$0xff]
      %v331 = vld [vmem:[%s3 + $0xb8] sm:$0xff]
      %v332 = vld [vmem:[%s3 + $0xc0] sm:$0xff]
      %v333 = vld [vmem:[%s3 + $0xc8] sm:$0xff]
      %v334 = vld [vmem:[%s3 + $0xd0] sm:$0xff]
      %v335 = vld [vmem:[%s3 + $0xd8] sm:$0xff]
      %v336 = vld [vmem:[%s3 + $0xe0] sm:$0xff]
      %v337 = vld [vmem:[%s3 + $0xe8] sm:$0xff]
      %v338 = vld [vmem:[%s3 + $0xf0] sm:$0xff]
      %v339 = vld [vmem:[%s3 + $0xf8] sm:$0xff]
      %v340 = vld [vmem:[%s4] sm:$0xf]
      %v342 = vlaneseq
      %v343 = vshrl.u32 %v342, 7
      %v344 = vsub.s32 0, %v343
      %v345 = vrot.slane %v340, %v344
      %v346 = vlaneseq
      %v347 = vshrl.u32 %v346, 7
      %v348 = vsub.s32 1, %v347
      %v349 = vrot.slane %v340, %v348
      %v350 = vlaneseq
      %v351 = vshrl.u32 %v350, 7
      %v352 = vsub.s32 2, %v351
      %v353 = vrot.slane %v340, %v352
      %v354 = vlaneseq
      %v355 = vshrl.u32 %v354, 7
      %v356 = vsub.s32 3, %v355
      %v357 = vrot.slane %v340, %v356
      %v394 = vunpack.c.l.b16 %v308
      %v395 = vunpack.c.h.b16 %v308
      %v396 = vunpack.c.l.b16 %v309
      %v397 = vunpack.c.h.b16 %v309
      %v398 = vunpack.c.l.b16 %v310
      %v399 = vunpack.c.h.b16 %v310
      %v400 = vunpack.c.l.b16 %v311
      %v401 = vunpack.c.h.b16 %v311
      %v402 = vunpack.c.l.b16 %v312
      %v403 = vunpack.c.h.b16 %v312
      %v404 = vunpack.c.l.b16 %v313
      %v405 = vunpack.c.h.b16 %v313
      %v406 = vunpack.c.l.b16 %v314
      %v407 = vunpack.c.h.b16 %v314
      %v408 = vunpack.c.l.b16 %v315
      %v409 = vunpack.c.h.b16 %v315
      %v410 = vunpack.c.l.b16 %v316
      %v411 = vunpack.c.h.b16 %v316
      %v412 = vunpack.c.l.b16 %v317
      %v413 = vunpack.c.h.b16 %v317
      %v414 = vunpack.c.l.b16 %v318
      %v415 = vunpack.c.h.b16 %v318
      %v416 = vunpack.c.l.b16 %v319
      %v417 = vunpack.c.h.b16 %v319
      %v418 = vunpack.c.l.b16 %v320
      %v419 = vunpack.c.h.b16 %v320
      %v420 = vunpack.c.l.b16 %v321
      %v421 = vunpack.c.h.b16 %v321
      %v422 = vunpack.c.l.b16 %v322
      %v423 = vunpack.c.h.b16 %v322
      %v424 = vunpack.c.l.b16 %v323
      %v425 = vunpack.c.h.b16 %v323
      %v426 = vunpack.c.l.b16 %v324
      %v427 = vunpack.c.h.b16 %v324
      %v428 = vunpack.c.l.b16 %v325
      %v429 = vunpack.c.h.b16 %v325
      %v430 = vunpack.c.l.b16 %v326
      %v431 = vunpack.c.h.b16 %v326
      %v432 = vunpack.c.l.b16 %v327
      %v433 = vunpack.c.h.b16 %v327
      %v434 = vunpack.c.l.b16 %v328
      %v435 = vunpack.c.h.b16 %v328
      %v436 = vunpack.c.l.b16 %v329
      %v437 = vunpack.c.h.b16 %v329
      %v438 = vunpack.c.l.b16 %v330
      %v439 = vunpack.c.h.b16 %v330
      %v440 = vunpack.c.l.b16 %v331
      %v441 = vunpack.c.h.b16 %v331
      %v442 = vunpack.c.l.b16 %v332
      %v443 = vunpack.c.h.b16 %v332
      %v444 = vunpack.c.l.b16 %v333
      %v445 = vunpack.c.h.b16 %v333
      %v446 = vunpack.c.l.b16 %v334
      %v447 = vunpack.c.h.b16 %v334
      %v448 = vunpack.c.l.b16 %v335
      %v449 = vunpack.c.h.b16 %v335
      %v450 = vunpack.c.l.b16 %v336
      %v451 = vunpack.c.h.b16 %v336
      %v452 = vunpack.c.l.b16 %v337
      %v453 = vunpack.c.h.b16 %v337
      %v454 = vunpack.c.l.b16 %v338
      %v455 = vunpack.c.h.b16 %v338
      %v456 = vunpack.c.l.b16 %v339
      %v457 = vunpack.c.h.b16 %v339
      %v458 = vpack.c.b16 %v398, %v394
      %v459 = vpack.c.b16 %v399, %v395
      %v460 = vpack.c.b16 %v400, %v396
      %v461 = vpack.c.b16 %v401, %v397
      %v462 = vpack.c.b16 %v406, %v402
      %v463 = vpack.c.b16 %v407, %v403
      %v464 = vpack.c.b16 %v408, %v404
      %v465 = vpack.c.b16 %v409, %v405
      %v466 = vpack.c.b16 %v414, %v410
      %v467 = vpack.c.b16 %v415, %v411
      %v468 = vpack.c.b16 %v416, %v412
      %v469 = vpack.c.b16 %v417, %v413
      %v470 = vpack.c.b16 %v422, %v418
      %v471 = vpack.c.b16 %v423, %v419
      %v472 = vpack.c.b16 %v424, %v420
      %v473 = vpack.c.b16 %v425, %v421
      %v474 = vpack.c.b16 %v430, %v426
      %v475 = vpack.c.b16 %v431, %v427
      %v476 = vpack.c.b16 %v432, %v428
      %v477 = vpack.c.b16 %v433, %v429
      %v478 = vpack.c.b16 %v438, %v434
      %v479 = vpack.c.b16 %v439, %v435
      %v480 = vpack.c.b16 %v440, %v436
      %v481 = vpack.c.b16 %v441, %v437
      %v482 = vpack.c.b16 %v446, %v442
      %v483 = vpack.c.b16 %v447, %v443
      %v484 = vpack.c.b16 %v448, %v444
      %v485 = vpack.c.b16 %v449, %v445
      %v486 = vpack.c.b16 %v454, %v450
      %v487 = vpack.c.b16 %v455, %v451
      %v488 = vpack.c.b16 %v456, %v452
      %v489 = vpack.c.b16 %v457, %v453
      %522 = vmatprep.subr.bf16.mxu0 %v459
      %523 = vmatpush1.bf16.msra.mxu0 %v458
      %524 = vmatprep.subr.bf16.mxu0 %v463
      %525 = vmatpush1.bf16.msra.mxu0 %v462
      %526 = vmatprep.subr.bf16.mxu0 %v467
      %527 = vmatpush1.bf16.msra.mxu0 %v466
      %528 = vmatprep.subr.bf16.mxu0 %v471
      %529 = vmatpush1.bf16.msra.mxu0 %v470
      %530 = vmatprep.subr.bf16.mxu0 %v475
      %531 = vmatpush1.bf16.msra.mxu0 %v474
      %532 = vmatprep.subr.bf16.mxu0 %v479
      %533 = vmatpush1.bf16.msra.mxu0 %v478
      %534 = vmatprep.subr.bf16.mxu0 %v483
      %535 = vmatpush1.bf16.msra.mxu0 %v482
      %536 = vmatprep.subr.bf16.mxu0 %v487
      %537 = vmatpush1.bf16.msra.mxu0 %v486
      %538 = vmatprep.subr.bf16.mxu0 0
      %539 = vmatpush1.bf16.msra.mxu0 0
      %540 = vmatprep.subr.bf16.mxu0 0
      %541 = vmatpush1.bf16.msra.mxu0 0
      %542 = vmatprep.subr.bf16.mxu0 0
      %543 = vmatpush1.bf16.msra.mxu0 0
      %544 = vmatprep.subr.bf16.mxu0 0
      %545 = vmatpush1.bf16.msra.mxu0 0
      %546 = vmatprep.subr.bf16.mxu0 0
      %547 = vmatpush1.bf16.msra.mxu0 0
      %548 = vmatprep.subr.bf16.mxu0 0
      %549 = vmatpush1.bf16.msra.mxu0 0
      %550 = vmatprep.subr.bf16.mxu0 0
      %551 = vmatpush1.bf16.msra.mxu0 0
      %552 = vmatprep.subr.bf16.mxu0 0
      %553 = vmatpush1.bf16.msra.mxu0 0
      %554 = vmatprep.mubr.bf16.mxu0 0
      %555 = vmatmul.mubr.bf16.gmra.mrb[0].mxu0 %v307
      %v556 = vpop.f32.mrb[0].mxu0
      %v557 = vadd.f32 %v345, %v556
      %v558 = vpop.f32.mrb[0].mxu0
      %v559 = vadd.f32 %v349, %v558
      %v560 = vpop.f32.mrb[0].mxu0
      %v561 = vpop.f32.mrb[0].mxu0
      %562 = vdwg.mxu0
      %563 = vmatprep.subr.bf16.mxu0 %v461
      %564 = vmatpush1.bf16.msra.mxu0 %v460
      %565 = vmatprep.subr.bf16.mxu0 %v465
      %566 = vmatpush1.bf16.msra.mxu0 %v464
      %567 = vmatprep.subr.bf16.mxu0 %v469
      %568 = vmatpush1.bf16.msra.mxu0 %v468
      %569 = vmatprep.subr.bf16.mxu0 %v473
      %570 = vmatpush1.bf16.msra.mxu0 %v472
      %571 = vmatprep.subr.bf16.mxu0 %v477
      %572 = vmatpush1.bf16.msra.mxu0 %v476
      %573 = vmatprep.subr.bf16.mxu0 %v481
      %574 = vmatpush1.bf16.msra.mxu0 %v480
      %575 = vmatprep.subr.bf16.mxu0 %v485
      %576 = vmatpush1.bf16.msra.mxu0 %v484
      %577 = vmatprep.subr.bf16.mxu0 %v489
      %578 = vmatpush1.bf16.msra.mxu0 %v488
      %579 = vmatprep.subr.bf16.mxu0 0
      %580 = vmatpush1.bf16.msra.mxu0 0
      %581 = vmatprep.subr.bf16.mxu0 0
      %582 = vmatpush1.bf16.msra.mxu0 0
      %583 = vmatprep.subr.bf16.mxu0 0
      %584 = vmatpush1.bf16.msra.mxu0 0
      %585 = vmatprep.subr.bf16.mxu0 0
      %586 = vmatpush1.bf16.msra.mxu0 0
      %587 = vmatprep.subr.bf16.mxu0 0
      %588 = vmatpush1.bf16.msra.mxu0 0
      %589 = vmatprep.subr.bf16.mxu0 0
      %590 = vmatpush1.bf16.msra.mxu0 0
      %591 = vmatprep.subr.bf16.mxu0 0
      %592 = vmatpush1.bf16.msra.mxu0 0
      %593 = vmatprep.subr.bf16.mxu0 0
      %594 = vmatpush1.bf16.msra.mxu0 0
      %595 = vmatprep.mubr.bf16.mxu0 0
      %596 = vmatmul.mubr.bf16.gmra.mrb[0].mxu0 %v307
      %v597 = vpop.f32.mrb[0].mxu0
      %v598 = vadd.f32 %v353, %v597
      %v599 = vpop.f32.mrb[0].mxu0
      %v600 = vadd.f32 %v357, %v599
      %v601 = vpop.f32.mrb[0].mxu0
      %v602 = vpop.f32.mrb[0].mxu0
      %603 = vdwg.mxu0
      %v604 = vmul.f32 %v557, 0.5
      %v605 = vmul.f32 %v559, 0.5
      %v606 = vmul.f32 %v598, 0.5
      %v607 = vmul.f32 %v600, 0.5
      %v608 = vmul.f32 %v557, 0.70710677
      %v609 = vmul.f32 %v559, 0.70710677
      %v610 = vmul.f32 %v598, 0.70710677
      %v611 = vmul.f32 %v600, 0.70710677
      %v612 = verf.f32.pop %v608
      %v613 = verf.f32.pop %v609
      %v614 = verf.f32.pop %v610
      %v615 = verf.f32.pop %v611
      %v616 = vadd.f32 %v612, 1.0
      %v617 = vadd.f32 %v613, 1.0
      %v618 = vadd.f32 %v614, 1.0
      %v619 = vadd.f32 %v615, 1.0
      %v620 = vmul.f32 %v604, %v616
      %v621 = vmul.f32 %v605, %v617
      %v622 = vmul.f32 %v606, %v618
      %v623 = vmul.f32 %v607, %v619
      %v624 = vpack.c.bf16 %v620, %v620
      %v625 = vpack.c.bf16 %v621, %v621
      %v626 = vpack.c.bf16 %v622, %v622
      %v627 = vpack.c.bf16 %v623, %v623
      %v628 = vld [vmem:[%s5] sm:$0xf]
      %v629 = vld [vmem:[%s5 + $0x4] sm:$0xf]
      %v630 = vld [vmem:[%s5 + $0x8] sm:$0xf]
      %v631 = vld [vmem:[%s5 + $0xc] sm:$0xf]
      %v632 = vld [vmem:[%s5 + $0x10] sm:$0xf]
      %v633 = vld [vmem:[%s5 + $0x14] sm:$0xf]
      %v634 = vld [vmem:[%s5 + $0x18] sm:$0xf]
      %v635 = vld [vmem:[%s5 + $0x1c] sm:$0xf]
      %v636 = vld [vmem:[%s5 + $0x20] sm:$0xf]
      %v637 = vld [vmem:[%s5 + $0x24] sm:$0xf]
      %v638 = vld [vmem:[%s5 + $0x28] sm:$0xf]
      %v639 = vld [vmem:[%s5 + $0x2c] sm:$0xf]
      %v640 = vld [vmem:[%s5 + $0x30] sm:$0xf]
      %v641 = vld [vmem:[%s5 + $0x34] sm:$0xf]
      %v642 = vld [vmem:[%s5 + $0x38] sm:$0xf]
      %v643 = vld [vmem:[%s5 + $0x3c] sm:$0xf]
      %v644 = vld [vmem:[%s5 + $0x40] sm:$0xf]
      %v645 = vld [vmem:[%s5 + $0x44] sm:$0xf]
      %v646 = vld [vmem:[%s5 + $0x48] sm:$0xf]
      %v647 = vld [vmem:[%s5 + $0x4c] sm:$0xf]
      %v648 = vld [vmem:[%s5 + $0x50] sm:$0xf]
      %v649 = vld [vmem:[%s5 + $0x54] sm:$0xf]
      %v650 = vld [vmem:[%s5 + $0x58] sm:$0xf]
      %v651 = vld [vmem:[%s5 + $0x5c] sm:$0xf]
      %v652 = vld [vmem:[%s5 + $0x60] sm:$0xf]
      %v653 = vld [vmem:[%s5 + $0x64] sm:$0xf]
      %v654 = vld [vmem:[%s5 + $0x68] sm:$0xf]
      %v655 = vld [vmem:[%s5 + $0x6c] sm:$0xf]
      %v656 = vld [vmem:[%s5 + $0x70] sm:$0xf]
      %v657 = vld [vmem:[%s5 + $0x74] sm:$0xf]
      %v658 = vld [vmem:[%s5 + $0x78] sm:$0xf]
      %v659 = vld [vmem:[%s5 + $0x7c] sm:$0xf]
      %v660 = vld [vmem:[%s5 + $0x80] sm:$0xf]
      %v661 = vld [vmem:[%s5 + $0x84] sm:$0xf]
      %v662 = vld [vmem:[%s5 + $0x88] sm:$0xf]
      %v663 = vld [vmem:[%s5 + $0x8c] sm:$0xf]
      %v664 = vld [vmem:[%s5 + $0x90] sm:$0xf]
      %v665 = vld [vmem:[%s5 + $0x94] sm:$0xf]
      %v666 = vld [vmem:[%s5 + $0x98] sm:$0xf]
      %v667 = vld [vmem:[%s5 + $0x9c] sm:$0xf]
      %v668 = vld [vmem:[%s5 + $0xa0] sm:$0xf]
      %v669 = vld [vmem:[%s5 + $0xa4] sm:$0xf]
      %v670 = vld [vmem:[%s5 + $0xa8] sm:$0xf]
      %v671 = vld [vmem:[%s5 + $0xac] sm:$0xf]
      %v672 = vld [vmem:[%s5 + $0xb0] sm:$0xf]
      %v673 = vld [vmem:[%s5 + $0xb4] sm:$0xf]
      %v674 = vld [vmem:[%s5 + $0xb8] sm:$0xf]
      %v675 = vld [vmem:[%s5 + $0xbc] sm:$0xf]
      %v676 = vld [vmem:[%s5 + $0xc0] sm:$0xf]
      %v677 = vld [vmem:[%s5 + $0xc4] sm:$0xf]
      %v678 = vld [vmem:[%s5 + $0xc8] sm:$0xf]
      %v679 = vld [vmem:[%s5 + $0xcc] sm:$0xf]
      %v680 = vld [vmem:[%s5 + $0xd0] sm:$0xf]
      %v681 = vld [vmem:[%s5 + $0xd4] sm:$0xf]
      %v682 = vld [vmem:[%s5 + $0xd8] sm:$0xf]
      %v683 = vld [vmem:[%s5 + $0xdc] sm:$0xf]
      %v684 = vld [vmem:[%s5 + $0xe0] sm:$0xf]
      %v685 = vld [vmem:[%s5 + $0xe4] sm:$0xf]
      %v686 = vld [vmem:[%s5 + $0xe8] sm:$0xf]
      %v687 = vld [vmem:[%s5 + $0xec] sm:$0xf]
      %v688 = vld [vmem:[%s5 + $0xf0] sm:$0xf]
      %v689 = vld [vmem:[%s5 + $0xf4] sm:$0xf]
      %v690 = vld [vmem:[%s5 + $0xf8] sm:$0xf]
      %v691 = vld [vmem:[%s5 + $0xfc] sm:$0xf]
      %v692 = vld [vmem:[%s6] sm:$0x1]
      %v694 = vlaneseq
      %v695 = vshrl.u32 %v694, 7
      %v696 = vsub.s32 0, %v695
      %v697 = vrot.slane %v692, %v696
      %v763 = vunpack.c.l.b16 %v628
      %v764 = vunpack.c.l.b16 %v629
      %v765 = vunpack.c.l.b16 %v630
      %v766 = vunpack.c.l.b16 %v631
      %v767 = vunpack.c.l.b16 %v632
      %v768 = vunpack.c.l.b16 %v633
      %v769 = vunpack.c.l.b16 %v634
      %v770 = vunpack.c.l.b16 %v635
      %v771 = vunpack.c.l.b16 %v636
      %v772 = vunpack.c.l.b16 %v637
      %v773 = vunpack.c.l.b16 %v638
      %v774 = vunpack.c.l.b16 %v639
      %v775 = vunpack.c.l.b16 %v640
      %v776 = vunpack.c.l.b16 %v641
      %v777 = vunpack.c.l.b16 %v642
      %v778 = vunpack.c.l.b16 %v643
      %v779 = vunpack.c.l.b16 %v644
      %v780 = vunpack.c.l.b16 %v645
      %v781 = vunpack.c.l.b16 %v646
      %v782 = vunpack.c.l.b16 %v647
      %v783 = vunpack.c.l.b16 %v648
      %v784 = vunpack.c.l.b16 %v649
      %v785 = vunpack.c.l.b16 %v650
      %v786 = vunpack.c.l.b16 %v651
      %v787 = vunpack.c.l.b16 %v652
      %v788 = vunpack.c.l.b16 %v653
      %v789 = vunpack.c.l.b16 %v654
      %v790 = vunpack.c.l.b16 %v655
      %v791 = vunpack.c.l.b16 %v656
      %v792 = vunpack.c.l.b16 %v657
      %v793 = vunpack.c.l.b16 %v658
      %v794 = vunpack.c.l.b16 %v659
      %v795 = vunpack.c.l.b16 %v660
      %v796 = vunpack.c.l.b16 %v661
      %v797 = vunpack.c.l.b16 %v662
      %v798 = vunpack.c.l.b16 %v663
      %v799 = vunpack.c.l.b16 %v664
      %v800 = vunpack.c.l.b16 %v665
      %v801 = vunpack.c.l.b16 %v666
      %v802 = vunpack.c.l.b16 %v667
      %v803 = vunpack.c.l.b16 %v668
      %v804 = vunpack.c.l.b16 %v669
      %v805 = vunpack.c.l.b16 %v670
      %v806 = vunpack.c.l.b16 %v671
      %v807 = vunpack.c.l.b16 %v672
      %v808 = vunpack.c.l.b16 %v673
      %v809 = vunpack.c.l.b16 %v674
      %v810 = vunpack.c.l.b16 %v675
      %v811 = vunpack.c.l.b16 %v676
      %v812 = vunpack.c.l.b16 %v677
      %v813 = vunpack.c.l.b16 %v678
      %v814 = vunpack.c.l.b16 %v679
      %v815 = vunpack.c.l.b16 %v680
      %v816 = vunpack.c.l.b16 %v681
      %v817 = vunpack.c.l.b16 %v682
      %v818 = vunpack.c.l.b16 %v683
      %v819 = vunpack.c.l.b16 %v684
      %v820 = vunpack.c.l.b16 %v685
      %v821 = vunpack.c.l.b16 %v686
      %v822 = vunpack.c.l.b16 %v687
      %v823 = vunpack.c.l.b16 %v688
      %v824 = vunpack.c.l.b16 %v689
      %v825 = vunpack.c.l.b16 %v690
      %v826 = vunpack.c.l.b16 %v691
      %v827 = vpack.c.b16 %v764, %v763
      %v828 = vpack.c.b16 %v766, %v765
      %v829 = vpack.c.b16 %v768, %v767
      %v830 = vpack.c.b16 %v770, %v769
      %v831 = vpack.c.b16 %v772, %v771
      %v832 = vpack.c.b16 %v774, %v773
      %v833 = vpack.c.b16 %v776, %v775
      %v834 = vpack.c.b16 %v778, %v777
      %v835 = vpack.c.b16 %v780, %v779
      %v836 = vpack.c.b16 %v782, %v781
      %v837 = vpack.c.b16 %v784, %v783
      %v838 = vpack.c.b16 %v786, %v785
      %v839 = vpack.c.b16 %v788, %v787
      %v840 = vpack.c.b16 %v790, %v789
      %v841 = vpack.c.b16 %v792, %v791
      %v842 = vpack.c.b16 %v794, %v793
      %v843 = vpack.c.b16 %v796, %v795
      %v844 = vpack.c.b16 %v798, %v797
      %v845 = vpack.c.b16 %v800, %v799
      %v846 = vpack.c.b16 %v802, %v801
      %v847 = vpack.c.b16 %v804, %v803
      %v848 = vpack.c.b16 %v806, %v805
      %v849 = vpack.c.b16 %v808, %v807
      %v850 = vpack.c.b16 %v810, %v809
      %v851 = vpack.c.b16 %v812, %v811
      %v852 = vpack.c.b16 %v814, %v813
      %v853 = vpack.c.b16 %v816, %v815
      %v854 = vpack.c.b16 %v818, %v817
      %v855 = vpack.c.b16 %v820, %v819
      %v856 = vpack.c.b16 %v822, %v821
      %v857 = vpack.c.b16 %v824, %v823
      %v858 = vpack.c.b16 %v826, %v825
      %891 = vmatprep.subr.bf16.mxu0 0
      %892 = vmatpush1.bf16.msra.mxu0 %v827
      %893 = vmatprep.subr.bf16.mxu0 0
      %894 = vmatpush1.bf16.msra.mxu0 %v828
      %895 = vmatprep.subr.bf16.mxu0 0
      %896 = vmatpush1.bf16.msra.mxu0 %v829
      %897 = vmatprep.subr.bf16.mxu0 0
      %898 = vmatpush1.bf16.msra.mxu0 %v830
      %899 = vmatprep.subr.bf16.mxu0 0
      %900 = vmatpush1.bf16.msra.mxu0 %v831
      %901 = vmatprep.subr.bf16.mxu0 0
      %902 = vmatpush1.bf16.msra.mxu0 %v832
      %903 = vmatprep.subr.bf16.mxu0 0
      %904 = vmatpush1.bf16.msra.mxu0 %v833
      %905 = vmatprep.subr.bf16.mxu0 0
      %906 = vmatpush1.bf16.msra.mxu0 %v834
      %907 = vmatprep.subr.bf16.mxu0 0
      %908 = vmatpush1.bf16.msra.mxu0 %v835
      %909 = vmatprep.subr.bf16.mxu0 0
      %910 = vmatpush1.bf16.msra.mxu0 %v836
      %911 = vmatprep.subr.bf16.mxu0 0
      %912 = vmatpush1.bf16.msra.mxu0 %v837
      %913 = vmatprep.subr.bf16.mxu0 0
      %914 = vmatpush1.bf16.msra.mxu0 %v838
      %915 = vmatprep.subr.bf16.mxu0 0
      %916 = vmatpush1.bf16.msra.mxu0 %v839
      %917 = vmatprep.subr.bf16.mxu0 0
      %918 = vmatpush1.bf16.msra.mxu0 %v840
      %919 = vmatprep.subr.bf16.mxu0 0
      %920 = vmatpush1.bf16.msra.mxu0 %v841
      %921 = vmatprep.subr.bf16.mxu0 0
      %922 = vmatpush1.bf16.msra.mxu0 %v842
      %923 = vmatprep.mubr.bf16.mxu0 %v625
      %924 = vmatmul.mubr.bf16.gmra.mrb[0].mxu0 %v624
      %v925 = vpop.f32.mrb[0].mxu0
      %v926 = vadd.f32 %v697, %v925
      %v927 = vpop.f32.mrb[0].mxu0
      %v928 = vpop.f32.mrb[0].mxu0
      %v929 = vpop.f32.mrb[0].mxu0
      %930 = vdwg.mxu0
      %931 = vmatprep.subr.bf16.mxu0 0
      %932 = vmatpush1.bf16.msra.mxu0 %v843
      %933 = vmatprep.subr.bf16.mxu0 0
      %934 = vmatpush1.bf16.msra.mxu0 %v844
      %935 = vmatprep.subr.bf16.mxu0 0
      %936 = vmatpush1.bf16.msra.mxu0 %v845
      %937 = vmatprep.subr.bf16.mxu0 0
      %938 = vmatpush1.bf16.msra.mxu0 %v846
      %939 = vmatprep.subr.bf16.mxu0 0
      %940 = vmatpush1.bf16.msra.mxu0 %v847
      %941 = vmatprep.subr.bf16.mxu0 0
      %942 = vmatpush1.bf16.msra.mxu0 %v848
      %943 = vmatprep.subr.bf16.mxu0 0
      %944 = vmatpush1.bf16.msra.mxu0 %v849
      %945 = vmatprep.subr.bf16.mxu0 0
      %946 = vmatpush1.bf16.msra.mxu0 %v850
      %947 = vmatprep.subr.bf16.mxu0 0
      %948 = vmatpush1.bf16.msra.mxu0 %v851
      %949 = vmatprep.subr.bf16.mxu0 0
      %950 = vmatpush1.bf16.msra.mxu0 %v852
      %951 = vmatprep.subr.bf16.mxu0 0
      %952 = vmatpush1.bf16.msra.mxu0 %v853
      %953 = vmatprep.subr.bf16.mxu0 0
      %954 = vmatpush1.bf16.msra.mxu0 %v854
      %955 = vmatprep.subr.bf16.mxu0 0
      %956 = vmatpush1.bf16.msra.mxu0 %v855
      %957 = vmatprep.subr.bf16.mxu0 0
      %958 = vmatpush1.bf16.msra.mxu0 %v856
      %959 = vmatprep.subr.bf16.mxu0 0
      %960 = vmatpush1.bf16.msra.mxu0 %v857
      %961 = vmatprep.subr.bf16.mxu0 0
      %962 = vmatpush1.bf16.msra.mxu0 %v858
      %963 = vmatprep.mubr.bf16.mxu0 %v627
      %964 = vmatmul.mubr.bf16.gmra.mrb[0].mxu0 %v626
      %v965 = vpop.f32.mrb[0].mxu0
      %v966 = vadd.f32 %v926, %v965
      %v967 = vpop.f32.mrb[0].mxu0
      %v968 = vpop.f32.mrb[0].mxu0
      %v969 = vpop.f32.mrb[0].mxu0
      %970 = vdwg.mxu0
      %v971 = vadd.f32 %v275, %v966
      %972 = vst [vmem:[%s273] sm:$0x1f] %v971
      %p973 = scmp.lt.s32.totalorder %s18, 1
      %s974 = scalar_select %p973, %s18, 1
      %s975 = smul.addr %s974, 8
      %s976 = scalar_lea.vmem %s7, %s975
      // Predicated region
      $region49: #{_lambda_.8} parent=47 // pred_check
        %p977 = pneg %p188
      $region50: #{_lambda_.8} parent=47 // pred_check_branch
        %979 = sbr.rel (%p977) target = $region52
      $region51: #{_lambda_.8} parent=47 // pred_region
        _
      $region52: #{_lambda_.8} parent=47 // pred_fallthru
        _
    $region48: #{_lambda_.8} parent=5 // pred_fallthru
      _
    %p980 = scmp.le.s32.totalorder 2, %s13
    // Predicated region
    $region53: #{_lambda_.8} parent=5 // pred_check
      %p981 = pneg %p980
    $region54: #{_lambda_.8} parent=5 // pred_check_branch
      %983 = sbr.rel (%p981) target = $region56
    $region55: #{_lambda_.8} parent=5 // pred_region
      %s984 = ssub.s32 %s13, 2
      // Predicated region
      $region57: #{_lambda_.8} parent=55 // pred_check
        %p985 = pneg %p194
      $region58: #{_lambda_.8} parent=55 // pred_check_branch
        %987 = sbr.rel (%p985) target = $region60
      $region59: #{_lambda_.8} parent=55 // pred_region
        %p988 = scmp.lt.s32.totalorder %s19, 1
        %s989 = scalar_select %p988, %s19, 1
        %s990 = smul.addr %s989, 8
        %s991 = scalar_lea.vmem %s7, %s990
      $region60: #{_lambda_.8} parent=55 // pred_fallthru
        _
    $region56: #{_lambda_.8} parent=5 // pred_fallthru
      _
  $region6: #{_lambda_.8} parent=0 // loop_footer
    %s17 = sadd.s32 1, %s13
  $region7: #{_lambda_.8} parent=0 // loop_footer_branch
    %12 = sbr.rel target = $region3
  $region8: #{_lambda_.8} parent=0 // loop_exit
    _

</llo_original>
